<compile_context>
chip_gen: v5e
topology: v5e:2x2
jax: 0.10.0
libtpu: 0.0.40
codegen_flags: <defaults>
</compile_context>

<pallas_src>
import jax
import jax.numpy as jnp
from jax.experimental import pallas as pl
from jax.experimental.pallas import tpu as pltpu

NEG_SLOPE = 0.01   # nn.LeakyReLU() default
BN_EPS = 1e-5      # nn.BatchNorm default

C_PAD = 128        # conv output channels padded 120 -> 128 (lane-dense)
CIN_PAD = 8        # stage-0 input channels padded 4 -> 8
F_PAD = 256        # flattened features padded 240 -> 256 (lane-dense)
COUT = 120
H_IN = 32          # 120 * (32 / 2**4) == 240 == nn.Linear(240, ...) input
N_STAGES = 4


def _leaky(x):
    return jnp.where(x >= 0, x, NEG_SLOPE * x)


# ---------------------------------------------------------------------------
# Fused Pallas kernel: conv stack + MLP head
# ---------------------------------------------------------------------------
def cnn4_kernel(x_ref, wc0_ref, wc_ref, csc_ref, csh_ref,
                w6_ref, s6_ref, sh6_ref, w10_ref, b10_ref, o_ref, pbuf):
    """Whole CNN_4 forward (eval mode), batch packed into the M dimension.

    x_ref   : [B*H, 8]        f32   input rows (sample-major, then H); ch padded 4->8
    wc0_ref : [3, 8, 128]     bf16  stage-0 conv taps  wc0[k, cin, cout]
    wc_ref  : [3, 3, 128, 128]bf16  stage-1..3 conv taps wc[s, k, cin, cout]
    csc/csh : [4, 1, 128]     f32   folded BN2d scale / shift per conv stage
    w6_ref  : [256, 256]      bf16  Linear(240,240) weight, flatten perm folded
    s6/sh6  : [1, 256]        f32   folded BN1d scale / shift
    w10_ref : [1, 256]        f32   Linear(240,1) weight row (zero padded)
    b10_ref : [1, 1]          f32   Linear(240,1) bias
    o_ref   : [B, 1]          f32   output
    pbuf    : [B*H, 128]      f32   scratch for max-pool / head row split
    """
    batch = o_ref.shape[0]
    m0 = x_ref.shape[0]
    h = m0 // batch

    def conv_stage(a, h_cur, w0, w1, w2, scale, shift):
        # a: [B*h_cur, K] f32 activation slab (sample-major rows).
        assert (h_cur & (h_cur - 1)) == 0            # H=32 -> h is a power of 2
        mm = a.shape[0]
        row = jax.lax.broadcasted_iota(jnp.int32, (mm, 1), 0)
        rloc = row & (h_cur - 1)                     # row index within its sample
        # Shifted taps via sublane roll (XLU); zero the per-sample border rows
        # so the roll does not leak across samples (padding=(1,0) semantics).
        x_m = jnp.where(rloc == 0, 0.0, pltpu.roll(a, 1, axis=0))           # x[t-1]
        x_p = jnp.where(rloc == h_cur - 1, 0.0, pltpu.roll(a, mm - 1, axis=0))  # x[t+1]
        # (3,1) conv == 3 shifted matmuls over the whole batch (bf16 MXU, f32 acc).
        y = (jnp.dot(x_m.astype(jnp.bfloat16), w0, preferred_element_type=jnp.float32)
             + jnp.dot(a.astype(jnp.bfloat16), w1, preferred_element_type=jnp.float32)
             + jnp.dot(x_p.astype(jnp.bfloat16), w2, preferred_element_type=jnp.float32))
        # Folded BatchNorm2d affine + LeakyReLU (f32 epilogue).
        y = _leaky(y * scale + shift)                                       # [mm, 128]
        # MaxPool2d((2,1),(2,1)): pairwise row max.  h is even, so global
        # (2i, 2i+1) pairs never cross a sample boundary.
        pbuf[pl.ds(0, mm), :] = y
        return jnp.maximum(pbuf[pl.ds(0, mm // 2, 2), :],
                           pbuf[pl.ds(1, mm // 2, 2), :])                   # [mm//2,128]

    # --- stage 0: Cin = 4 (padded 8), Cout = 120 (padded 128) ---
    a = x_ref[...]                                                          # [B*H, 8] f32
    a = conv_stage(a, h, wc0_ref[0, :, :], wc0_ref[1, :, :], wc0_ref[2, :, :],
                   csc_ref[0, :, :], csh_ref[0, :, :])
    h //= 2
    # --- stages 1..3: 120 -> 120 ---
    for s in range(wc_ref.shape[0]):
        a = conv_stage(a, h, wc_ref[s, 0, :, :], wc_ref[s, 1, :, :], wc_ref[s, 2, :, :],
                       csc_ref[s + 1, :, :], csh_ref[s + 1, :, :])
        h //= 2
    # a: [B*2, 128] f32, h == 2

    # --- MLP head: flatten + Linear(240,240) + BN1d + LeakyReLU + Linear(240,1) ---
    # Split per-sample spatial rows h=0 / h=1 and place them at lane offsets
    # 0 / 128 of one operand; the NCHW flatten order (f = 2*c + h) is already
    # folded into w6, so the whole head is a single [B,256]x[256,256] matmul.
    mfin = a.shape[0]                                                       # 2*B
    pbuf[pl.ds(0, mfin), :] = a
    f0 = pbuf[pl.ds(0, batch, 2), :]                                        # h = 0 rows
    f1 = pbuf[pl.ds(1, batch, 2), :]                                        # h = 1 rows
    feat = jnp.concatenate([f0, f1], axis=-1).astype(jnp.bfloat16)          # [B, 256]
    acc = jnp.dot(feat, w6_ref[...], preferred_element_type=jnp.float32)    # [B, 256]
    acc = _leaky(acc * s6_ref[...] + sh6_ref[...])
    # Linear(240,1): broadcast multiply + lane reduction (no N=1 MXU matmul).
    out = jnp.sum(acc * w10_ref[...], axis=-1, keepdims=True) + b10_ref[...]
    o_ref[...] = out.astype(o_ref.dtype)


# ---------------------------------------------------------------------------
# Parameter construction (synthetic weights, BN folded, padded & permuted)
# ---------------------------------------------------------------------------
def _fold_bn(gamma, beta, mean, var, bias):
    scale = gamma / jnp.sqrt(var + BN_EPS)
    shift = beta + scale * (bias - mean)
    return scale, shift


def init_params(key):
    ks = iter(jax.random.split(key, 64))
    nrm = lambda s, std: std * jax.random.normal(next(ks), s, jnp.float32)
    uni = lambda s: jax.random.uniform(next(ks), s, jnp.float32, 0.5, 1.5)

    # --- conv stages: a0 (4->120) and a1/a2/a3 (120->120) ---
    cins = [4, COUT, COUT, COUT]
    wc0 = jnp.zeros((3, CIN_PAD, C_PAD), jnp.float32)
    wc = jnp.zeros((N_STAGES - 1, 3, C_PAD, C_PAD), jnp.float32)
    csc = jnp.zeros((N_STAGES, 1, C_PAD), jnp.float32)
    csh = jnp.zeros((N_STAGES, 1, C_PAD), jnp.float32)
    for s, cin in enumerate(cins):
        w = nrm((COUT, cin, 3), (cin * 3) ** -0.5)        # torch [Cout, Cin, K]
        bias = nrm((COUT,), 0.1)
        gamma = 1.0 + nrm((COUT,), 0.1)
        beta = nrm((COUT,), 0.1)
        mean = nrm((COUT,), 0.1)
        var = uni((COUT,))
        scale, shift = _fold_bn(gamma, beta, mean, var, bias)
        wk = jnp.transpose(w, (2, 1, 0))                  # [K, Cin, Cout]
        if s == 0:
            wc0 = wc0.at[:, :cin, :COUT].set(wk)
        else:
            wc = wc.at[s - 1, :, :cin, :COUT].set(wk)
        csc = csc.at[s, 0, :COUT].set(scale)
        csh = csh.at[s, 0, :COUT].set(shift)

    # --- r6: Linear(240,240) + r7: BatchNorm1d(240), flatten perm folded ---
    w6 = nrm((240, 240), 240 ** -0.5)                     # torch [out, in]
    b6 = nrm((240,), 0.1)
    g6 = 1.0 + nrm((240,), 0.1)
    be6 = nrm((240,), 0.1)
    m6 = nrm((240,), 0.1)
    v6 = uni((240,))
    s6, sh6 = _fold_bn(g6, be6, m6, v6, b6)
    w6t = w6.T                                            # [in=240, out=240]
    # Feature index f = 2*c + h; lanes 0..127 carry h=0, lanes 128..255 h=1.
    w6f = jnp.zeros((2 * C_PAD, F_PAD), jnp.float32)
    w6f = w6f.at[:COUT, :240].set(w6t[0::2, :])           # h = 0 rows
    w6f = w6f.at[C_PAD:C_PAD + COUT, :240].set(w6t[1::2, :])  # h = 1 rows
    s6p = jnp.zeros((1, F_PAD), jnp.float32).at[0, :240].set(s6)
    sh6p = jnp.zeros((1, F_PAD), jnp.float32).at[0, :240].set(sh6)

    # --- r10: Linear(240, 1) ---
    w10 = nrm((1, 240), 240 ** -0.5)
    b10 = nrm((1,), 0.1)
    w10p = jnp.zeros((1, F_PAD), jnp.float32).at[0, :240].set(w10[0])

    return {
        "wc0": wc0.astype(jnp.bfloat16),
        "wc": wc.astype(jnp.bfloat16),
        "csc": csc, "csh": csh,
        "w6": w6f.astype(jnp.bfloat16),
        "s6": s6p, "sh6": sh6p,
        "w10": w10p,
        "b10": b10.reshape(1, 1),
    }


# ---------------------------------------------------------------------------
# Forward wrapper (single fused pallas_call, everything VMEM-resident)
# ---------------------------------------------------------------------------
def cnn4_forward(x, params):
    """x: NCHW [B, 4, H, 1] with 120 * (H // 16) == 240  ->  [B, 1]."""
    b, cin, h, _ = x.shape
    # NCHW -> [B*H, Cin] rows (sample-major, then H); pad channels only to 8.
    xr = jnp.transpose(x[..., 0], (0, 2, 1)).reshape(b * h, cin)
    xr = jnp.pad(xr, ((0, 0), (0, CIN_PAD - cin))).astype(jnp.float32)

    vmem = pl.BlockSpec(memory_space=pltpu.MemorySpace.VMEM)
    return pl.pallas_call(
        cnn4_kernel,
        out_shape=jax.ShapeDtypeStruct((b, 1), jnp.float32),
        in_specs=[vmem] * 10,
        out_specs=vmem,
        scratch_shapes=[pltpu.VMEM((b * h, C_PAD), jnp.float32)],
    )(xr, params["wc0"], params["wc"], params["csc"], params["csh"],
      params["w6"], params["s6"], params["sh6"], params["w10"], params["b10"])


if __name__ == "__main__":
    key = jax.random.PRNGKey(0)
    pkey, xkey = jax.random.split(key)
    params = init_params(pkey)

    # B=2, C=4, H=32, W=1  ->  flatten = 120 * (32 / 2**4) * 1 = 240
    x = jax.random.normal(xkey, (2, 4, H_IN, 1), jnp.float32)

    out = jax.jit(cnn4_forward)(x, params)
    out = jax.block_until_ready(out)
    assert out.shape == (2, 1) and out.dtype == jnp.float32
    print("KERNEL_OK")
</pallas_src>

<mosaic_0001>
module attributes {stable_mosaic.version = 11 : i64} {
  func.func @cnn4_kernel(%arg0: memref<64x8xf32, #tpu.memory_space<vmem>>, %arg1: memref<3x8x128xbf16, #tpu.memory_space<vmem>>, %arg2: memref<3x3x128x128xbf16, #tpu.memory_space<vmem>>, %arg3: memref<4x1x128xf32, #tpu.memory_space<vmem>>, %arg4: memref<4x1x128xf32, #tpu.memory_space<vmem>>, %arg5: memref<256x256xbf16, #tpu.memory_space<vmem>>, %arg6: memref<1x256xf32, #tpu.memory_space<vmem>>, %arg7: memref<1x256xf32, #tpu.memory_space<vmem>>, %arg8: memref<1x256xf32, #tpu.memory_space<vmem>>, %arg9: memref<1x1xf32, #tpu.memory_space<vmem>>, %arg10: memref<2x1xf32, #tpu.memory_space<vmem>>, %arg11: memref<64x128xf32, #tpu.memory_space<vmem>>) attributes {dimension_semantics = [], scalar_prefetch = 0 : i64, scratch_operands = 1 : i64, tpu.core_type = #tpu.core_type<tc>} {
    %c0 = arith.constant 0 : index
    %c0_0 = arith.constant 0 : index
    %0 = vector.load %arg0[%c0, %c0_0] : memref<64x8xf32, #tpu.memory_space<vmem>>, vector<64x8xf32>
    %c0_1 = arith.constant 0 : index
    %c0_2 = arith.constant 0 : index
    %c0_3 = arith.constant 0 : index
    %1 = vector.load %arg1[%c0_1, %c0_2, %c0_3] : memref<3x8x128xbf16, #tpu.memory_space<vmem>>, vector<1x8x128xbf16>
    %2 = vector.shape_cast %1 : vector<1x8x128xbf16> to vector<8x128xbf16>
    %c1 = arith.constant 1 : index
    %c0_4 = arith.constant 0 : index
    %c0_5 = arith.constant 0 : index
    %3 = vector.load %arg1[%c1, %c0_4, %c0_5] : memref<3x8x128xbf16, #tpu.memory_space<vmem>>, vector<1x8x128xbf16>
    %4 = vector.shape_cast %3 : vector<1x8x128xbf16> to vector<8x128xbf16>
    %c2 = arith.constant 2 : index
    %c0_6 = arith.constant 0 : index
    %c0_7 = arith.constant 0 : index
    %5 = vector.load %arg1[%c2, %c0_6, %c0_7] : memref<3x8x128xbf16, #tpu.memory_space<vmem>>, vector<1x8x128xbf16>
    %6 = vector.shape_cast %5 : vector<1x8x128xbf16> to vector<8x128xbf16>
    %c0_8 = arith.constant 0 : index
    %c0_9 = arith.constant 0 : index
    %c0_10 = arith.constant 0 : index
    %7 = vector.load %arg3[%c0_8, %c0_9, %c0_10] : memref<4x1x128xf32, #tpu.memory_space<vmem>>, vector<1x1x128xf32>
    %8 = vector.shape_cast %7 : vector<1x1x128xf32> to vector<1x128xf32>
    %c0_11 = arith.constant 0 : index
    %c0_12 = arith.constant 0 : index
    %c0_13 = arith.constant 0 : index
    %9 = vector.load %arg4[%c0_11, %c0_12, %c0_13] : memref<4x1x128xf32, #tpu.memory_space<vmem>>, vector<1x1x128xf32>
    %10 = vector.shape_cast %9 : vector<1x1x128xf32> to vector<1x128xf32>
    %11 = tpu.iota {dimensions = array<i32: 0>} : vector<64x1xi32>
    %c31_i32 = arith.constant 31 : i32
    %12 = vector.broadcast %c31_i32 : i32 to vector<64x1xi32>
    %13 = arith.andi %11, %12 : vector<64x1xi32>
    %c0_i32 = arith.constant 0 : i32
    %14 = vector.broadcast %c0_i32 : i32 to vector<64x1xi32>
    %15 = arith.cmpi eq, %13, %14 : vector<64x1xi32>
    %c1_i32 = arith.constant 1 : i32
    %16 = tpu.dynamic_rotate %0 by %c1_i32 dim 0 : vector<64x8xf32>, i32 -> vector<64x8xf32>
    %cst = arith.constant 0.000000e+00 : f32
    %17 = vector.shape_cast %15 : vector<64x1xi1> to vector<64x1xi1>
    %18 = vector.broadcast %17 : vector<64x1xi1> to vector<64x8xi1>
    %19 = vector.broadcast %cst : f32 to vector<64x8xf32>
    %20 = arith.select %18, %19, %16 : vector<64x8xi1>, vector<64x8xf32>
    %c31_i32_14 = arith.constant 31 : i32
    %21 = vector.broadcast %c31_i32_14 : i32 to vector<64x1xi32>
    %22 = arith.cmpi eq, %13, %21 : vector<64x1xi32>
    %c63_i32 = arith.constant 63 : i32
    %23 = tpu.dynamic_rotate %0 by %c63_i32 dim 0 : vector<64x8xf32>, i32 -> vector<64x8xf32>
    %cst_15 = arith.constant 0.000000e+00 : f32
    %24 = vector.shape_cast %22 : vector<64x1xi1> to vector<64x1xi1>
    %25 = vector.broadcast %24 : vector<64x1xi1> to vector<64x8xi1>
    %26 = vector.broadcast %cst_15 : f32 to vector<64x8xf32>
    %27 = arith.select %25, %26, %23 : vector<64x8xi1>, vector<64x8xf32>
    %28 = arith.truncf %20 : vector<64x8xf32> to vector<64x8xbf16>
    %cst_16 = arith.constant dense<0.000000e+00> : vector<64x128xf32>
    %29 = tpu.matmul %28, %2, %cst_16 {dimension_numbers = #tpu.dot_dimension_numbers<[1], [0], [0], [1], [0, 0, 1, 1], [], []>} : vector<64x8xbf16>, vector<8x128xbf16>, vector<64x128xf32> -> vector<64x128xf32>
    %30 = arith.truncf %0 : vector<64x8xf32> to vector<64x8xbf16>
    %cst_17 = arith.constant dense<0.000000e+00> : vector<64x128xf32>
    %31 = tpu.matmul %30, %4, %cst_17 {dimension_numbers = #tpu.dot_dimension_numbers<[1], [0], [0], [1], [0, 0, 1, 1], [], []>} : vector<64x8xbf16>, vector<8x128xbf16>, vector<64x128xf32> -> vector<64x128xf32>
    %32 = arith.addf %29, %31 : vector<64x128xf32>
    %33 = arith.truncf %27 : vector<64x8xf32> to vector<64x8xbf16>
    %cst_18 = arith.constant dense<0.000000e+00> : vector<64x128xf32>
    %34 = tpu.matmul %33, %6, %cst_18 {dimension_numbers = #tpu.dot_dimension_numbers<[1], [0], [0], [1], [0, 0, 1, 1], [], []>} : vector<64x8xbf16>, vector<8x128xbf16>, vector<64x128xf32> -> vector<64x128xf32>
    %35 = arith.addf %32, %34 : vector<64x128xf32>
    %36 = vector.broadcast %8 : vector<1x128xf32> to vector<64x128xf32>
    %37 = arith.mulf %35, %36 : vector<64x128xf32>
    %38 = vector.broadcast %10 : vector<1x128xf32> to vector<64x128xf32>
    %39 = arith.addf %37, %38 : vector<64x128xf32>
    %cst_19 = arith.constant 0.000000e+00 : f32
    %40 = vector.broadcast %cst_19 : f32 to vector<64x128xf32>
    %41 = arith.cmpf oge, %39, %40 : vector<64x128xf32>
    %cst_20 = arith.constant 0.00999999977 : f32
    %42 = vector.broadcast %cst_20 : f32 to vector<64x128xf32>
    %43 = arith.mulf %42, %39 : vector<64x128xf32>
    %44 = arith.select %41, %39, %43 : vector<64x128xi1>, vector<64x128xf32>
    %c0_21 = arith.constant 0 : index
    %c0_22 = arith.constant 0 : index
    %45 = vector.load %arg11[%c0_21, %c0_22] : memref<64x128xf32, #tpu.memory_space<vmem>>, vector<64x128xf32>
    tpu.vector_store %arg11[%c0_21, %c0_22], %44 {strides = array<i32>} : memref<64x128xf32, #tpu.memory_space<vmem>>, vector<64x128xf32>,
    %c0_23 = arith.constant 0 : index
    %c0_24 = arith.constant 0 : index
    %46 = tpu.strided_load %arg11[%c0_23, %c0_24] {strides = array<i32: 2, 1>} : memref<64x128xf32, #tpu.memory_space<vmem>>, vector<32x128xf32>
    %c1_25 = arith.constant 1 : index
    %c0_26 = arith.constant 0 : index
    %47 = tpu.strided_load %arg11[%c1_25, %c0_26] {strides = array<i32: 2, 1>} : memref<64x128xf32, #tpu.memory_space<vmem>>, vector<32x128xf32>
    %48 = arith.maximumf %46, %47 : vector<32x128xf32>
    %c0_27 = arith.constant 0 : index
    %c0_28 = arith.constant 0 : index
    %c0_29 = arith.constant 0 : index
    %c0_30 = arith.constant 0 : index
    %49 = vector.load %arg2[%c0_27, %c0_28, %c0_29, %c0_30] : memref<3x3x128x128xbf16, #tpu.memory_space<vmem>>, vector<1x1x128x128xbf16>
    %50 = vector.shape_cast %49 : vector<1x1x128x128xbf16> to vector<128x128xbf16>
    %c0_31 = arith.constant 0 : index
    %c1_32 = arith.constant 1 : index
    %c0_33 = arith.constant 0 : index
    %c0_34 = arith.constant 0 : index
    %51 = vector.load %arg2[%c0_31, %c1_32, %c0_33, %c0_34] : memref<3x3x128x128xbf16, #tpu.memory_space<vmem>>, vector<1x1x128x128xbf16>
    %52 = vector.shape_cast %51 : vector<1x1x128x128xbf16> to vector<128x128xbf16>
    %c0_35 = arith.constant 0 : index
    %c2_36 = arith.constant 2 : index
    %c0_37 = arith.constant 0 : index
    %c0_38 = arith.constant 0 : index
    %53 = vector.load %arg2[%c0_35, %c2_36, %c0_37, %c0_38] : memref<3x3x128x128xbf16, #tpu.memory_space<vmem>>, vector<1x1x128x128xbf16>
    %54 = vector.shape_cast %53 : vector<1x1x128x128xbf16> to vector<128x128xbf16>
    %c1_39 = arith.constant 1 : index
    %c0_40 = arith.constant 0 : index
    %c0_41 = arith.constant 0 : index
    %55 = vector.load %arg3[%c1_39, %c0_40, %c0_41] : memref<4x1x128xf32, #tpu.memory_space<vmem>>, vector<1x1x128xf32>
    %56 = vector.shape_cast %55 : vector<1x1x128xf32> to vector<1x128xf32>
    %c1_42 = arith.constant 1 : index
    %c0_43 = arith.constant 0 : index
    %c0_44 = arith.constant 0 : index
    %57 = vector.load %arg4[%c1_42, %c0_43, %c0_44] : memref<4x1x128xf32, #tpu.memory_space<vmem>>, vector<1x1x128xf32>
    %58 = vector.shape_cast %57 : vector<1x1x128xf32> to vector<1x128xf32>
    %59 = tpu.iota {dimensions = array<i32: 0>} : vector<32x1xi32>
    %c15_i32 = arith.constant 15 : i32
    %60 = vector.broadcast %c15_i32 : i32 to vector<32x1xi32>
    %61 = arith.andi %59, %60 : vector<32x1xi32>
    %c0_i32_45 = arith.constant 0 : i32
    %62 = vector.broadcast %c0_i32_45 : i32 to vector<32x1xi32>
    %63 = arith.cmpi eq, %61, %62 : vector<32x1xi32>
    %c1_i32_46 = arith.constant 1 : i32
    %64 = tpu.dynamic_rotate %48 by %c1_i32_46 dim 0 : vector<32x128xf32>, i32 -> vector<32x128xf32>
    %cst_47 = arith.constant 0.000000e+00 : f32
    %65 = vector.shape_cast %63 : vector<32x1xi1> to vector<32x1xi1>
    %66 = vector.broadcast %65 : vector<32x1xi1> to vector<32x128xi1>
    %67 = vector.broadcast %cst_47 : f32 to vector<32x128xf32>
    %68 = arith.select %66, %67, %64 : vector<32x128xi1>, vector<32x128xf32>
    %c15_i32_48 = arith.constant 15 : i32
    %69 = vector.broadcast %c15_i32_48 : i32 to vector<32x1xi32>
    %70 = arith.cmpi eq, %61, %69 : vector<32x1xi32>
    %c31_i32_49 = arith.constant 31 : i32
    %71 = tpu.dynamic_rotate %48 by %c31_i32_49 dim 0 : vector<32x128xf32>, i32 -> vector<32x128xf32>
    %cst_50 = arith.constant 0.000000e+00 : f32
    %72 = vector.shape_cast %70 : vector<32x1xi1> to vector<32x1xi1>
    %73 = vector.broadcast %72 : vector<32x1xi1> to vector<32x128xi1>
    %74 = vector.broadcast %cst_50 : f32 to vector<32x128xf32>
    %75 = arith.select %73, %74, %71 : vector<32x128xi1>, vector<32x128xf32>
    %76 = arith.truncf %68 : vector<32x128xf32> to vector<32x128xbf16>
    %cst_51 = arith.constant dense<0.000000e+00> : vector<32x128xf32>
    %77 = tpu.matmul %76, %50, %cst_51 {dimension_numbers = #tpu.dot_dimension_numbers<[1], [0], [0], [1], [0, 0, 1, 1], [], []>} : vector<32x128xbf16>, vector<128x128xbf16>, vector<32x128xf32> -> vector<32x128xf32>
    %78 = arith.truncf %48 : vector<32x128xf32> to vector<32x128xbf16>
    %cst_52 = arith.constant dense<0.000000e+00> : vector<32x128xf32>
    %79 = tpu.matmul %78, %52, %cst_52 {dimension_numbers = #tpu.dot_dimension_numbers<[1], [0], [0], [1], [0, 0, 1, 1], [], []>} : vector<32x128xbf16>, vector<128x128xbf16>, vector<32x128xf32> -> vector<32x128xf32>
    %80 = arith.addf %77, %79 : vector<32x128xf32>
    %81 = arith.truncf %75 : vector<32x128xf32> to vector<32x128xbf16>
    %cst_53 = arith.constant dense<0.000000e+00> : vector<32x128xf32>
    %82 = tpu.matmul %81, %54, %cst_53 {dimension_numbers = #tpu.dot_dimension_numbers<[1], [0], [0], [1], [0, 0, 1, 1], [], []>} : vector<32x128xbf16>, vector<128x128xbf16>, vector<32x128xf32> -> vector<32x128xf32>
    %83 = arith.addf %80, %82 : vector<32x128xf32>
    %84 = vector.broadcast %56 : vector<1x128xf32> to vector<32x128xf32>
    %85 = arith.mulf %83, %84 : vector<32x128xf32>
    %86 = vector.broadcast %58 : vector<1x128xf32> to vector<32x128xf32>
    %87 = arith.addf %85, %86 : vector<32x128xf32>
    %cst_54 = arith.constant 0.000000e+00 : f32
    %88 = vector.broadcast %cst_54 : f32 to vector<32x128xf32>
    %89 = arith.cmpf oge, %87, %88 : vector<32x128xf32>
    %cst_55 = arith.constant 0.00999999977 : f32
    %90 = vector.broadcast %cst_55 : f32 to vector<32x128xf32>
    %91 = arith.mulf %90, %87 : vector<32x128xf32>
    %92 = arith.select %89, %87, %91 : vector<32x128xi1>, vector<32x128xf32>
    %c0_56 = arith.constant 0 : index
    %c0_57 = arith.constant 0 : index
    %93 = vector.load %arg11[%c0_56, %c0_57] : memref<64x128xf32, #tpu.memory_space<vmem>>, vector<32x128xf32>
    tpu.vector_store %arg11[%c0_56, %c0_57], %92 {strides = array<i32>} : memref<64x128xf32, #tpu.memory_space<vmem>>, vector<32x128xf32>,
    %c0_58 = arith.constant 0 : index
    %c0_59 = arith.constant 0 : index
    %94 = tpu.strided_load %arg11[%c0_58, %c0_59] {strides = array<i32: 2, 1>} : memref<64x128xf32, #tpu.memory_space<vmem>>, vector<16x128xf32>
    %c1_60 = arith.constant 1 : index
    %c0_61 = arith.constant 0 : index
    %95 = tpu.strided_load %arg11[%c1_60, %c0_61] {strides = array<i32: 2, 1>} : memref<64x128xf32, #tpu.memory_space<vmem>>, vector<16x128xf32>
    %96 = arith.maximumf %94, %95 : vector<16x128xf32>
    %c1_62 = arith.constant 1 : index
    %c0_63 = arith.constant 0 : index
    %c0_64 = arith.constant 0 : index
    %c0_65 = arith.constant 0 : index
    %97 = vector.load %arg2[%c1_62, %c0_63, %c0_64, %c0_65] : memref<3x3x128x128xbf16, #tpu.memory_space<vmem>>, vector<1x1x128x128xbf16>
    %98 = vector.shape_cast %97 : vector<1x1x128x128xbf16> to vector<128x128xbf16>
    %c1_66 = arith.constant 1 : index
    %c1_67 = arith.constant 1 : index
    %c0_68 = arith.constant 0 : index
    %c0_69 = arith.constant 0 : index
    %99 = vector.load %arg2[%c1_66, %c1_67, %c0_68, %c0_69] : memref<3x3x128x128xbf16, #tpu.memory_space<vmem>>, vector<1x1x128x128xbf16>
    %100 = vector.shape_cast %99 : vector<1x1x128x128xbf16> to vector<128x128xbf16>
    %c1_70 = arith.constant 1 : index
    %c2_71 = arith.constant 2 : index
    %c0_72 = arith.constant 0 : index
    %c0_73 = arith.constant 0 : index
    %101 = vector.load %arg2[%c1_70, %c2_71, %c0_72, %c0_73] : memref<3x3x128x128xbf16, #tpu.memory_space<vmem>>, vector<1x1x128x128xbf16>
    %102 = vector.shape_cast %101 : vector<1x1x128x128xbf16> to vector<128x128xbf16>
    %c2_74 = arith.constant 2 : index
    %c0_75 = arith.constant 0 : index
    %c0_76 = arith.constant 0 : index
    %103 = vector.load %arg3[%c2_74, %c0_75, %c0_76] : memref<4x1x128xf32, #tpu.memory_space<vmem>>, vector<1x1x128xf32>
    %104 = vector.shape_cast %103 : vector<1x1x128xf32> to vector<1x128xf32>
    %c2_77 = arith.constant 2 : index
    %c0_78 = arith.constant 0 : index
    %c0_79 = arith.constant 0 : index
    %105 = vector.load %arg4[%c2_77, %c0_78, %c0_79] : memref<4x1x128xf32, #tpu.memory_space<vmem>>, vector<1x1x128xf32>
    %106 = vector.shape_cast %105 : vector<1x1x128xf32> to vector<1x128xf32>
    %107 = tpu.iota {dimensions = array<i32: 0>} : vector<16x1xi32>
    %c7_i32 = arith.constant 7 : i32
    %108 = vector.broadcast %c7_i32 : i32 to vector<16x1xi32>
    %109 = arith.andi %107, %108 : vector<16x1xi32>
    %c0_i32_80 = arith.constant 0 : i32
    %110 = vector.broadcast %c0_i32_80 : i32 to vector<16x1xi32>
    %111 = arith.cmpi eq, %109, %110 : vector<16x1xi32>
    %c1_i32_81 = arith.constant 1 : i32
    %112 = tpu.dynamic_rotate %96 by %c1_i32_81 dim 0 : vector<16x128xf32>, i32 -> vector<16x128xf32>
    %cst_82 = arith.constant 0.000000e+00 : f32
    %113 = vector.shape_cast %111 : vector<16x1xi1> to vector<16x1xi1>
    %114 = vector.broadcast %113 : vector<16x1xi1> to vector<16x128xi1>
    %115 = vector.broadcast %cst_82 : f32 to vector<16x128xf32>
    %116 = arith.select %114, %115, %112 : vector<16x128xi1>, vector<16x128xf32>
    %c7_i32_83 = arith.constant 7 : i32
    %117 = vector.broadcast %c7_i32_83 : i32 to vector<16x1xi32>
    %118 = arith.cmpi eq, %109, %117 : vector<16x1xi32>
    %c15_i32_84 = arith.constant 15 : i32
    %119 = tpu.dynamic_rotate %96 by %c15_i32_84 dim 0 : vector<16x128xf32>, i32 -> vector<16x128xf32>
    %cst_85 = arith.constant 0.000000e+00 : f32
    %120 = vector.shape_cast %118 : vector<16x1xi1> to vector<16x1xi1>
    %121 = vector.broadcast %120 : vector<16x1xi1> to vector<16x128xi1>
    %122 = vector.broadcast %cst_85 : f32 to vector<16x128xf32>
    %123 = arith.select %121, %122, %119 : vector<16x128xi1>, vector<16x128xf32>
    %124 = arith.truncf %116 : vector<16x128xf32> to vector<16x128xbf16>
    %cst_86 = arith.constant dense<0.000000e+00> : vector<16x128xf32>
    %125 = tpu.matmul %124, %98, %cst_86 {dimension_numbers = #tpu.dot_dimension_numbers<[1], [0], [0], [1], [0, 0, 1, 1], [], []>} : vector<16x128xbf16>, vector<128x128xbf16>, vector<16x128xf32> -> vector<16x128xf32>
    %126 = arith.truncf %96 : vector<16x128xf32> to vector<16x128xbf16>
    %cst_87 = arith.constant dense<0.000000e+00> : vector<16x128xf32>
    %127 = tpu.matmul %126, %100, %cst_87 {dimension_numbers = #tpu.dot_dimension_numbers<[1], [0], [0], [1], [0, 0, 1, 1], [], []>} : vector<16x128xbf16>, vector<128x128xbf16>, vector<16x128xf32> -> vector<16x128xf32>
    %128 = arith.addf %125, %127 : vector<16x128xf32>
    %129 = arith.truncf %123 : vector<16x128xf32> to vector<16x128xbf16>
    %cst_88 = arith.constant dense<0.000000e+00> : vector<16x128xf32>
    %130 = tpu.matmul %129, %102, %cst_88 {dimension_numbers = #tpu.dot_dimension_numbers<[1], [0], [0], [1], [0, 0, 1, 1], [], []>} : vector<16x128xbf16>, vector<128x128xbf16>, vector<16x128xf32> -> vector<16x128xf32>
    %131 = arith.addf %128, %130 : vector<16x128xf32>
    %132 = vector.broadcast %104 : vector<1x128xf32> to vector<16x128xf32>
    %133 = arith.mulf %131, %132 : vector<16x128xf32>
    %134 = vector.broadcast %106 : vector<1x128xf32> to vector<16x128xf32>
    %135 = arith.addf %133, %134 : vector<16x128xf32>
    %cst_89 = arith.constant 0.000000e+00 : f32
    %136 = vector.broadcast %cst_89 : f32 to vector<16x128xf32>
    %137 = arith.cmpf oge, %135, %136 : vector<16x128xf32>
    %cst_90 = arith.constant 0.00999999977 : f32
    %138 = vector.broadcast %cst_90 : f32 to vector<16x128xf32>
    %139 = arith.mulf %138, %135 : vector<16x128xf32>
    %140 = arith.select %137, %135, %139 : vector<16x128xi1>, vector<16x128xf32>
    %c0_91 = arith.constant 0 : index
    %c0_92 = arith.constant 0 : index
    %141 = vector.load %arg11[%c0_91, %c0_92] : memref<64x128xf32, #tpu.memory_space<vmem>>, vector<16x128xf32>
    tpu.vector_store %arg11[%c0_91, %c0_92], %140 {strides = array<i32>} : memref<64x128xf32, #tpu.memory_space<vmem>>, vector<16x128xf32>,
    %c0_93 = arith.constant 0 : index
    %c0_94 = arith.constant 0 : index
    %142 = tpu.strided_load %arg11[%c0_93, %c0_94] {strides = array<i32: 2, 1>} : memref<64x128xf32, #tpu.memory_space<vmem>>, vector<8x128xf32>
    %c1_95 = arith.constant 1 : index
    %c0_96 = arith.constant 0 : index
    %143 = tpu.strided_load %arg11[%c1_95, %c0_96] {strides = array<i32: 2, 1>} : memref<64x128xf32, #tpu.memory_space<vmem>>, vector<8x128xf32>
    %144 = arith.maximumf %142, %143 : vector<8x128xf32>
    %c2_97 = arith.constant 2 : index
    %c0_98 = arith.constant 0 : index
    %c0_99 = arith.constant 0 : index
    %c0_100 = arith.constant 0 : index
    %145 = vector.load %arg2[%c2_97, %c0_98, %c0_99, %c0_100] : memref<3x3x128x128xbf16, #tpu.memory_space<vmem>>, vector<1x1x128x128xbf16>
    %146 = vector.shape_cast %145 : vector<1x1x128x128xbf16> to vector<128x128xbf16>
    %c2_101 = arith.constant 2 : index
    %c1_102 = arith.constant 1 : index
    %c0_103 = arith.constant 0 : index
    %c0_104 = arith.constant 0 : index
    %147 = vector.load %arg2[%c2_101, %c1_102, %c0_103, %c0_104] : memref<3x3x128x128xbf16, #tpu.memory_space<vmem>>, vector<1x1x128x128xbf16>
    %148 = vector.shape_cast %147 : vector<1x1x128x128xbf16> to vector<128x128xbf16>
    %c2_105 = arith.constant 2 : index
    %c2_106 = arith.constant 2 : index
    %c0_107 = arith.constant 0 : index
    %c0_108 = arith.constant 0 : index
    %149 = vector.load %arg2[%c2_105, %c2_106, %c0_107, %c0_108] : memref<3x3x128x128xbf16, #tpu.memory_space<vmem>>, vector<1x1x128x128xbf16>
    %150 = vector.shape_cast %149 : vector<1x1x128x128xbf16> to vector<128x128xbf16>
    %c3 = arith.constant 3 : index
    %c0_109 = arith.constant 0 : index
    %c0_110 = arith.constant 0 : index
    %151 = vector.load %arg3[%c3, %c0_109, %c0_110] : memref<4x1x128xf32, #tpu.memory_space<vmem>>, vector<1x1x128xf32>
    %152 = vector.shape_cast %151 : vector<1x1x128xf32> to vector<1x128xf32>
    %c3_111 = arith.constant 3 : index
    %c0_112 = arith.constant 0 : index
    %c0_113 = arith.constant 0 : index
    %153 = vector.load %arg4[%c3_111, %c0_112, %c0_113] : memref<4x1x128xf32, #tpu.memory_space<vmem>>, vector<1x1x128xf32>
    %154 = vector.shape_cast %153 : vector<1x1x128xf32> to vector<1x128xf32>
    %155 = tpu.iota {dimensions = array<i32: 0>} : vector<8x1xi32>
    %c3_i32 = arith.constant 3 : i32
    %156 = vector.broadcast %c3_i32 : i32 to vector<8x1xi32>
    %157 = arith.andi %155, %156 : vector<8x1xi32>
    %c0_i32_114 = arith.constant 0 : i32
    %158 = vector.broadcast %c0_i32_114 : i32 to vector<8x1xi32>
    %159 = arith.cmpi eq, %157, %158 : vector<8x1xi32>
    %c1_i32_115 = arith.constant 1 : i32
    %160 = tpu.dynamic_rotate %144 by %c1_i32_115 dim 0 : vector<8x128xf32>, i32 -> vector<8x128xf32>
    %cst_116 = arith.constant 0.000000e+00 : f32
    %161 = vector.shape_cast %159 : vector<8x1xi1> to vector<8x1xi1>
    %162 = vector.broadcast %161 : vector<8x1xi1> to vector<8x128xi1>
    %163 = vector.broadcast %cst_116 : f32 to vector<8x128xf32>
    %164 = arith.select %162, %163, %160 : vector<8x128xi1>, vector<8x128xf32>
    %c3_i32_117 = arith.constant 3 : i32
    %165 = vector.broadcast %c3_i32_117 : i32 to vector<8x1xi32>
    %166 = arith.cmpi eq, %157, %165 : vector<8x1xi32>
    %c7_i32_118 = arith.constant 7 : i32
    %167 = tpu.dynamic_rotate %144 by %c7_i32_118 dim 0 : vector<8x128xf32>, i32 -> vector<8x128xf32>
    %cst_119 = arith.constant 0.000000e+00 : f32
    %168 = vector.shape_cast %166 : vector<8x1xi1> to vector<8x1xi1>
    %169 = vector.broadcast %168 : vector<8x1xi1> to vector<8x128xi1>
    %170 = vector.broadcast %cst_119 : f32 to vector<8x128xf32>
    %171 = arith.select %169, %170, %167 : vector<8x128xi1>, vector<8x128xf32>
    %172 = arith.truncf %164 : vector<8x128xf32> to vector<8x128xbf16>
    %cst_120 = arith.constant dense<0.000000e+00> : vector<8x128xf32>
    %173 = tpu.matmul %172, %146, %cst_120 {dimension_numbers = #tpu.dot_dimension_numbers<[1], [0], [0], [1], [0, 0, 1, 1], [], []>} : vector<8x128xbf16>, vector<128x128xbf16>, vector<8x128xf32> -> vector<8x128xf32>
    %174 = arith.truncf %144 : vector<8x128xf32> to vector<8x128xbf16>
    %cst_121 = arith.constant dense<0.000000e+00> : vector<8x128xf32>
    %175 = tpu.matmul %174, %148, %cst_121 {dimension_numbers = #tpu.dot_dimension_numbers<[1], [0], [0], [1], [0, 0, 1, 1], [], []>} : vector<8x128xbf16>, vector<128x128xbf16>, vector<8x128xf32> -> vector<8x128xf32>
    %176 = arith.addf %173, %175 : vector<8x128xf32>
    %177 = arith.truncf %171 : vector<8x128xf32> to vector<8x128xbf16>
    %cst_122 = arith.constant dense<0.000000e+00> : vector<8x128xf32>
    %178 = tpu.matmul %177, %150, %cst_122 {dimension_numbers = #tpu.dot_dimension_numbers<[1], [0], [0], [1], [0, 0, 1, 1], [], []>} : vector<8x128xbf16>, vector<128x128xbf16>, vector<8x128xf32> -> vector<8x128xf32>
    %179 = arith.addf %176, %178 : vector<8x128xf32>
    %180 = vector.broadcast %152 : vector<1x128xf32> to vector<8x128xf32>
    %181 = arith.mulf %179, %180 : vector<8x128xf32>
    %182 = vector.broadcast %154 : vector<1x128xf32> to vector<8x128xf32>
    %183 = arith.addf %181, %182 : vector<8x128xf32>
    %cst_123 = arith.constant 0.000000e+00 : f32
    %184 = vector.broadcast %cst_123 : f32 to vector<8x128xf32>
    %185 = arith.cmpf oge, %183, %184 : vector<8x128xf32>
    %cst_124 = arith.constant 0.00999999977 : f32
    %186 = vector.broadcast %cst_124 : f32 to vector<8x128xf32>
    %187 = arith.mulf %186, %183 : vector<8x128xf32>
    %188 = arith.select %185, %183, %187 : vector<8x128xi1>, vector<8x128xf32>
    %c0_125 = arith.constant 0 : index
    %c0_126 = arith.constant 0 : index
    %189 = vector.load %arg11[%c0_125, %c0_126] : memref<64x128xf32, #tpu.memory_space<vmem>>, vector<8x128xf32>
    tpu.vector_store %arg11[%c0_125, %c0_126], %188 {strides = array<i32>} : memref<64x128xf32, #tpu.memory_space<vmem>>, vector<8x128xf32>,
    %c0_127 = arith.constant 0 : index
    %c0_128 = arith.constant 0 : index
    %190 = tpu.strided_load %arg11[%c0_127, %c0_128] {strides = array<i32: 2, 1>} : memref<64x128xf32, #tpu.memory_space<vmem>>, vector<4x128xf32>
    %c1_129 = arith.constant 1 : index
    %c0_130 = arith.constant 0 : index
    %191 = tpu.strided_load %arg11[%c1_129, %c0_130] {strides = array<i32: 2, 1>} : memref<64x128xf32, #tpu.memory_space<vmem>>, vector<4x128xf32>
    %192 = arith.maximumf %190, %191 : vector<4x128xf32>
    %c0_131 = arith.constant 0 : index
    %c0_132 = arith.constant 0 : index
    %193 = vector.load %arg11[%c0_131, %c0_132] : memref<64x128xf32, #tpu.memory_space<vmem>>, vector<4x128xf32>
    tpu.vector_store %arg11[%c0_131, %c0_132], %192 {strides = array<i32>} : memref<64x128xf32, #tpu.memory_space<vmem>>, vector<4x128xf32>,
    %c0_133 = arith.constant 0 : index
    %c0_134 = arith.constant 0 : index
    %194 = tpu.strided_load %arg11[%c0_133, %c0_134] {strides = array<i32: 2, 1>} : memref<64x128xf32, #tpu.memory_space<vmem>>, vector<2x128xf32>
    %c1_135 = arith.constant 1 : index
    %c0_136 = arith.constant 0 : index
    %195 = tpu.strided_load %arg11[%c1_135, %c0_136] {strides = array<i32: 2, 1>} : memref<64x128xf32, #tpu.memory_space<vmem>>, vector<2x128xf32>
    %196 = tpu.concatenate %194, %195 in 1 : vector<2x128xf32>, vector<2x128xf32> -> vector<2x256xf32>
    %197 = arith.truncf %196 : vector<2x256xf32> to vector<2x256xbf16>
    %c0_137 = arith.constant 0 : index
    %c0_138 = arith.constant 0 : index
    %198 = vector.load %arg5[%c0_137, %c0_138] : memref<256x256xbf16, #tpu.memory_space<vmem>>, vector<256x256xbf16>
    %cst_139 = arith.constant dense<0.000000e+00> : vector<2x256xf32>
    %199 = tpu.matmul %197, %198, %cst_139 {dimension_numbers = #tpu.dot_dimension_numbers<[1], [0], [0], [1], [0, 0, 1, 1], [], []>} : vector<2x256xbf16>, vector<256x256xbf16>, vector<2x256xf32> -> vector<2x256xf32>
    %c0_140 = arith.constant 0 : index
    %c0_141 = arith.constant 0 : index
    %200 = vector.load %arg6[%c0_140, %c0_141] : memref<1x256xf32, #tpu.memory_space<vmem>>, vector<1x256xf32>
    %201 = vector.broadcast %200 : vector<1x256xf32> to vector<2x256xf32>
    %202 = arith.mulf %199, %201 : vector<2x256xf32>
    %c0_142 = arith.constant 0 : index
    %c0_143 = arith.constant 0 : index
    %203 = vector.load %arg7[%c0_142, %c0_143] : memref<1x256xf32, #tpu.memory_space<vmem>>, vector<1x256xf32>
    %204 = vector.broadcast %203 : vector<1x256xf32> to vector<2x256xf32>
    %205 = arith.addf %202, %204 : vector<2x256xf32>
    %cst_144 = arith.constant 0.000000e+00 : f32
    %206 = vector.broadcast %cst_144 : f32 to vector<2x256xf32>
    %207 = arith.cmpf oge, %205, %206 : vector<2x256xf32>
    %cst_145 = arith.constant 0.00999999977 : f32
    %208 = vector.broadcast %cst_145 : f32 to vector<2x256xf32>
    %209 = arith.mulf %208, %205 : vector<2x256xf32>
    %210 = arith.select %207, %205, %209 : vector<2x256xi1>, vector<2x256xf32>
    %c0_146 = arith.constant 0 : index
    %c0_147 = arith.constant 0 : index
    %211 = vector.load %arg8[%c0_146, %c0_147] : memref<1x256xf32, #tpu.memory_space<vmem>>, vector<1x256xf32>
    %212 = vector.broadcast %211 : vector<1x256xf32> to vector<2x256xf32>
    %213 = arith.mulf %210, %212 : vector<2x256xf32>
    %cst_148 = arith.constant dense<0.000000e+00> : vector<2xf32>
    %214 = vector.multi_reduction <add>, %213, %cst_148 [1] : vector<2x256xf32> to vector<2xf32>
    %215 = vector.shape_cast %214 : vector<2xf32> to vector<2x1xf32>
    %c0_149 = arith.constant 0 : index
    %c0_150 = arith.constant 0 : index
    %216 = vector.load %arg9[%c0_149, %c0_150] : memref<1x1xf32, #tpu.memory_space<vmem>>, vector<1x1xf32>
    %217 = vector.broadcast %216 : vector<1x1xf32> to vector<2x1xf32>
    %218 = arith.addf %215, %217 : vector<2x1xf32>
    %c0_151 = arith.constant 0 : index
    %c0_152 = arith.constant 0 : index
    %219 = vector.load %arg10[%c0_151, %c0_152] : memref<2x1xf32, #tpu.memory_space<vmem>>, vector<2x1xf32>
    tpu.vector_store %arg10[%c0_151, %c0_152], %218 {strides = array<i32>} : memref<2x1xf32, #tpu.memory_space<vmem>>, vector<2x1xf32>,
    return
  }
}

</mosaic_0001>

<llo_original>
// kernel: cnn4_forward.1
$region0: #{cnn4_forward.1}
  #allocation0 [shape = 'u32[]', space=smem, size = 0x4, offset = 0x4, fixed_abs, tag = 'smem constant byte address 0x4 - core index']
  #allocation1 [shape = 'u32[72,128]{1,0:T(1,128)}', space=vmem, size = 0x9000, scoped, tag = 'internal scratch']
  #allocation2 [shape = 'f32[64,128]{1,0:T(8,128)}', space=vmem, size = 0x8000, scoped, tag = 'scratch operand']
  #allocation3 [shape = 'f32[1,1]{1,0:T(1,128)S(1)}', space=vmem, size = 0x200, scoped, tag = 'scoped memory for cnn4_forward.1']
  %s0 = inlined_call_operand.vmem [shape: f32[64,8], index: 0, kind: input, shape index: {}]
  %s1 = inlined_call_operand.vmem [shape: bf16[3,8,128], index: 1, kind: input, shape index: {}]
  %s2 = inlined_call_operand.hbm [shape: bf16[3,3,128,128], index: 2, kind: input, shape index: {}]
  %s3 = inlined_call_operand.vmem [shape: f32[4,1,128], index: 3, kind: input, shape index: {}]
  %s4 = inlined_call_operand.vmem [shape: f32[4,1,128], index: 4, kind: input, shape index: {}]
  %s5 = inlined_call_operand.hbm [shape: bf16[256,256], index: 5, kind: input, shape index: {}]
  %s6 = inlined_call_operand.vmem [shape: f32[1,256], index: 6, kind: input, shape index: {}]
  %s7 = inlined_call_operand.vmem [shape: f32[1,256], index: 7, kind: input, shape index: {}]
  %s8 = inlined_call_operand.vmem [shape: f32[1,256], index: 8, kind: input, shape index: {}]
  %s9 = inlined_call_operand.<no memory space> [shape: f32[1,1], index: 9, kind: input, shape index: {}]
  %s10 = inlined_call_operand.vmem [shape: f32[2,1], index: 10, kind: output, shape index: {}]
  %s11 = sld [smem:[#allocation0]]
  $region58: #{cnn4_forward.1} parent=0
    _
  %s13 = ssub.s32 1, %s11
  %s14 = scalar_select 0, %s13, %s11
  %v15 = vstv %s9
  %16 = vst [vmem:[#allocation3] sm:$0x1] %v15
  $region1: #{cnn4_forward.1} parent=0
    #allocation4 [shape = 'u8[294912]{0}', space=vmem, size = 0x48000, scoped, tag = 'input window, operand 2, single buffered']
    #allocation5 [shape = 's32[1]{0}', space=sflag, size = 0x4, scoped, tag = 'scoped memory for cnn4_forward.1']
    #allocation6 [shape = 'u8[131072]{0}', space=vmem, size = 0x20000, scoped, tag = 'input window, operand 5, single buffered']
    #allocation7 [shape = 's32[1]{0}', space=sflag, size = 0x4, scoped, tag = 'scoped memory for cnn4_forward.1']
    %17 = vsyncpa [#allocation5], 0
    %18 = vsyncpa [#allocation7], 0
    // Predicated region
    $region2: #{cnn4_forward.1} parent=1 // pred_check
      _
    $region3: #{cnn4_forward.1} parent=1 // pred_check_branch
      %20 = sbr.rel (0) target = $region5
    $region4: #{cnn4_forward.1} parent=1 // pred_region
      _
    $region5: #{cnn4_forward.1} parent=1 // pred_fallthru
      _
    // Predicated region
    $region6: #{cnn4_forward.1} parent=1 // pred_check
      _
    $region7: #{cnn4_forward.1} parent=1 // pred_check_branch
      %22 = sbr.rel (0) target = $region9
    $region8: #{cnn4_forward.1} parent=1 // pred_region
      _
    $region9: #{cnn4_forward.1} parent=1 // pred_fallthru
      _
    // Predicated region
    $region10: #{cnn4_forward.1} parent=1 // pred_check
      _
    $region11: #{cnn4_forward.1} parent=1 // pred_check_branch
      %24 = sbr.rel (0) target = $region13
    $region12: #{cnn4_forward.1} parent=1 // pred_region
      %26 = vsyncadd [#allocation5], 0
      %s27 = sshll.u32 %s2, 4
      %s28 = int_to_ptr.hbm [resolvable:$true] %s27
      %s29 = sshll.u32 [#allocation4], 4
      %s30 = int_to_ptr.vmem [resolvable:$true] %s29
      %35 = dma.hbm_to_vmem [thread:$0]  %s28, 9216, %s30, [#allocation5], 64, 64, 4
    $region13: #{cnn4_forward.1} parent=1 // pred_fallthru
      _
    // Predicated region
    $region14: #{cnn4_forward.1} parent=1 // pred_check
      _
    $region15: #{cnn4_forward.1} parent=1 // pred_check_branch
      %37 = sbr.rel (0) target = $region17
    $region16: #{cnn4_forward.1} parent=1 // pred_region
      _
    $region17: #{cnn4_forward.1} parent=1 // pred_fallthru
      _
    // Predicated region
    $region18: #{cnn4_forward.1} parent=1 // pred_check
      _
    $region19: #{cnn4_forward.1} parent=1 // pred_check_branch
      %39 = sbr.rel (0) target = $region21
    $region20: #{cnn4_forward.1} parent=1 // pred_region
      _
    $region21: #{cnn4_forward.1} parent=1 // pred_fallthru
      _
    // Predicated region
    $region22: #{cnn4_forward.1} parent=1 // pred_check
      _
    $region23: #{cnn4_forward.1} parent=1 // pred_check_branch
      %41 = sbr.rel (0) target = $region25
    $region24: #{cnn4_forward.1} parent=1 // pred_region
      %43 = vsyncadd [#allocation7], 0
      %s44 = sshll.u32 %s5, 4
      %s45 = int_to_ptr.hbm [resolvable:$true] %s44
      %s46 = sshll.u32 [#allocation6], 4
      %s47 = int_to_ptr.vmem [resolvable:$true] %s46
      %52 = dma.hbm_to_vmem [thread:$0]  %s45, 4096, %s47, [#allocation7], 128, 128, 8
    $region25: #{cnn4_forward.1} parent=1 // pred_fallthru
      _
    // Predicated region
    $region26: #{cnn4_forward.1} parent=1 // pred_check
      _
    $region27: #{cnn4_forward.1} parent=1 // pred_check_branch
      %54 = sbr.rel (0) target = $region29
    $region28: #{cnn4_forward.1} parent=1 // pred_region
      _
    $region29: #{cnn4_forward.1} parent=1 // pred_fallthru
      _
    // Predicated region
    $region30: #{cnn4_forward.1} parent=1 // pred_check
      _
    $region31: #{cnn4_forward.1} parent=1 // pred_check_branch
      %56 = sbr.rel (0) target = $region33
    $region32: #{cnn4_forward.1} parent=1 // pred_region
      _
    $region33: #{cnn4_forward.1} parent=1 // pred_fallthru
      _
    // Predicated region
    $region34: #{cnn4_forward.1} parent=1 // pred_check
      _
    $region35: #{cnn4_forward.1} parent=1 // pred_check_branch
      %58 = sbr.rel (0) target = $region37
    $region36: #{cnn4_forward.1} parent=1 // pred_region
      _
    $region37: #{cnn4_forward.1} parent=1 // pred_fallthru
      _
    // Predicated region
    $region38: #{cnn4_forward.1} parent=1 // pred_check
      _
    $region39: #{cnn4_forward.1} parent=1 // pred_check_branch
      %60 = sbr.rel (0) target = $region41
    $region40: #{cnn4_forward.1} parent=1 // pred_region
      _
    $region41: #{cnn4_forward.1} parent=1 // pred_fallthru
      _
    // Predicated region
    $region42: #{cnn4_forward.1} parent=1 // pred_check
      _
    $region43: #{cnn4_forward.1} parent=1 // pred_check_branch
      %62 = sbr.rel (0) target = $region45
    $region44: #{cnn4_forward.1} parent=1 // pred_region
      %64 = dma.done [#allocation5], 9216
    $region45: #{cnn4_forward.1} parent=1 // pred_fallthru
      _
    // Predicated region
    $region46: #{cnn4_forward.1} parent=1 // pred_check
      _
    $region47: #{cnn4_forward.1} parent=1 // pred_check_branch
      %66 = sbr.rel (0) target = $region49
    $region48: #{cnn4_forward.1} parent=1 // pred_region
      %68 = dma.done [#allocation7], 4096
    $region49: #{cnn4_forward.1} parent=1 // pred_fallthru
      _
    %v70 = vld [vmem:[%s0] sm:$0xff]
    %v71 = vld [vmem:[%s0 + $0x8] sm:$0xff]
    %v72 = vld [vmem:[%s0 + $0x10] sm:$0xff]
    %v73 = vld [vmem:[%s0 + $0x18] sm:$0xff]
    %v74 = vld [vmem:[%s0 + $0x20] sm:$0xff]
    %v75 = vld [vmem:[%s0 + $0x28] sm:$0xff]
    %v76 = vld [vmem:[%s0 + $0x30] sm:$0xff]
    %v77 = vld [vmem:[%s0 + $0x38] sm:$0xff]
    %v78 = vld [vmem:[%s1] sm:$0xf]
    %s79 = scalar_lea.vmem %s1, 4
    %v80 = vld [vmem:[%s79] sm:$0xf]
    %s81 = scalar_lea.vmem %s1, 8
    %v82 = vld [vmem:[%s81] sm:$0xf]
    %v83 = vld [vmem:[%s3] sm:$0x1]
    %v84 = vld [vmem:[%s4] sm:$0x1]
    %v85 = vlaneseq
    %v86 = vshrl.u32 %v85, 7
    %v87 = vadd.s32 %v86, 8
    %v88 = vadd.s32 %v86, 16
    %v89 = vadd.s32 %v86, 24
    %v90 = vadd.s32 %v86, 32
    %v91 = vadd.s32 %v86, 40
    %v92 = vadd.s32 %v86, 48
    %v93 = vadd.s32 %v86, 56
    %v94 = vand.u32 %v86, 31
    %v95 = vand.u32 %v87, 31
    %v96 = vand.u32 %v88, 31
    %v97 = vand.u32 %v89, 31
    %v98 = vand.u32 %v90, 31
    %v99 = vand.u32 %v91, 31
    %v100 = vand.u32 %v92, 31
    %v101 = vand.u32 %v93, 31
    %vm102 = vcmp.eq.s32.totalorder %v94, 0
    %vm103 = vcmp.eq.s32.totalorder %v95, 0
    %vm104 = vcmp.eq.s32.totalorder %v96, 0
    %vm105 = vcmp.eq.s32.totalorder %v97, 0
    %vm106 = vcmp.eq.s32.totalorder %v98, 0
    %vm107 = vcmp.eq.s32.totalorder %v99, 0
    %vm108 = vcmp.eq.s32.totalorder %v100, 0
    %vm109 = vcmp.eq.s32.totalorder %v101, 0
    %v110 = vrot.slane %v70, 7
    %v111 = vrot.slane %v71, 7
    %v112 = vrot.slane %v72, 7
    %v113 = vrot.slane %v73, 7
    %v114 = vrot.slane %v74, 7
    %v115 = vrot.slane %v75, 7
    %v116 = vrot.slane %v76, 7
    %v117 = vrot.slane %v77, 7
    %vm118 = vcmp.lt.s32.totalorder %v86, 1
    %v119 = vsel %vm118, %v116, %v117
    %v120 = vsel %vm118, %v115, %v116
    %v121 = vsel %vm118, %v114, %v115
    %v122 = vsel %vm118, %v113, %v114
    %v123 = vsel %vm118, %v112, %v113
    %v124 = vsel %vm118, %v111, %v112
    %v125 = vsel %vm118, %v110, %v111
    %v126 = vsel %vm118, %v117, %v110
    %v127 = vsel %vm102, 1, 0
    %v128 = vsel %vm103, 1, 0
    %v129 = vsel %vm104, 1, 0
    %v130 = vsel %vm105, 1, 0
    %v131 = vsel %vm106, 1, 0
    %v132 = vsel %vm107, 1, 0
    %v133 = vsel %vm108, 1, 0
    %v134 = vsel %vm109, 1, 0
    %vm135 = vcmp.eq.s32.totalorder %v127, 1
    %vm136 = vcmp.eq.s32.totalorder %v128, 1
    %vm137 = vcmp.eq.s32.totalorder %v129, 1
    %vm138 = vcmp.eq.s32.totalorder %v130, 1
    %vm139 = vcmp.eq.s32.totalorder %v131, 1
    %vm140 = vcmp.eq.s32.totalorder %v132, 1
    %vm141 = vcmp.eq.s32.totalorder %v133, 1
    %vm142 = vcmp.eq.s32.totalorder %v134, 1
    %v143 = vsel %vm135, 0.0, %v126
    %v144 = vsel %vm136, 0.0, %v125
    %v145 = vsel %vm137, 0.0, %v124
    %v146 = vsel %vm138, 0.0, %v123
    %v147 = vsel %vm139, 0.0, %v122
    %v148 = vsel %vm140, 0.0, %v121
    %v149 = vsel %vm141, 0.0, %v120
    %v150 = vsel %vm142, 0.0, %v119
    %vm151 = vcmp.eq.s32.totalorder %v94, 31
    %vm152 = vcmp.eq.s32.totalorder %v95, 31
    %vm153 = vcmp.eq.s32.totalorder %v96, 31
    %vm154 = vcmp.eq.s32.totalorder %v97, 31
    %vm155 = vcmp.eq.s32.totalorder %v98, 31
    %vm156 = vcmp.eq.s32.totalorder %v99, 31
    %vm157 = vcmp.eq.s32.totalorder %v100, 31
    %vm158 = vcmp.eq.s32.totalorder %v101, 31
    %v159 = vrot.slane %v70, 1
    %v160 = vrot.slane %v71, 1
    %v161 = vrot.slane %v72, 1
    %v162 = vrot.slane %v73, 1
    %v163 = vrot.slane %v74, 1
    %v164 = vrot.slane %v75, 1
    %v165 = vrot.slane %v76, 1
    %v166 = vrot.slane %v77, 1
    %vm167 = vcmp.lt.s32.totalorder %v86, 7
    %v168 = vsel %vm167, %v165, %v166
    %v169 = vsel %vm167, %v164, %v165
    %v170 = vsel %vm167, %v163, %v164
    %v171 = vsel %vm167, %v162, %v163
    %v172 = vsel %vm167, %v161, %v162
    %v173 = vsel %vm167, %v160, %v161
    %v174 = vsel %vm167, %v159, %v160
    %v175 = vsel %vm167, %v166, %v159
    %v176 = vsel %vm151, 1, 0
    %v177 = vsel %vm152, 1, 0
    %v178 = vsel %vm153, 1, 0
    %v179 = vsel %vm154, 1, 0
    %v180 = vsel %vm155, 1, 0
    %v181 = vsel %vm156, 1, 0
    %v182 = vsel %vm157, 1, 0
    %v183 = vsel %vm158, 1, 0
    %vm184 = vcmp.eq.s32.totalorder %v176, 1
    %vm185 = vcmp.eq.s32.totalorder %v177, 1
    %vm186 = vcmp.eq.s32.totalorder %v178, 1
    %vm187 = vcmp.eq.s32.totalorder %v179, 1
    %vm188 = vcmp.eq.s32.totalorder %v180, 1
    %vm189 = vcmp.eq.s32.totalorder %v181, 1
    %vm190 = vcmp.eq.s32.totalorder %v182, 1
    %vm191 = vcmp.eq.s32.totalorder %v183, 1
    %v192 = vsel %vm184, 0.0, %v174
    %v193 = vsel %vm185, 0.0, %v173
    %v194 = vsel %vm186, 0.0, %v172
    %v195 = vsel %vm187, 0.0, %v171
    %v196 = vsel %vm188, 0.0, %v170
    %v197 = vsel %vm189, 0.0, %v169
    %v198 = vsel %vm190, 0.0, %v168
    %v199 = vsel %vm191, 0.0, %v175
    %v200 = vpack.c.bf16 %v144, %v143
    %v201 = vpack.c.bf16 %v146, %v145
    %v202 = vpack.c.bf16 %v148, %v147
    %v203 = vpack.c.bf16 %v150, %v149
    %v204 = vpack.c.bf16 %v71, %v70
    %v205 = vpack.c.bf16 %v73, %v72
    %v206 = vpack.c.bf16 %v75, %v74
    %v207 = vpack.c.bf16 %v77, %v76
    %vm208 = vcmask 64512
    %v210 = vsel %vm208, %v204, 0
    %v213 = vsel %vm208, %v205, 0
    %v216 = vsel %vm208, %v206, 0
    %v219 = vsel %vm208, %v207, 0
    %vm221 = vcmask 1043456
    %v223 = vsel %vm221, %v80, 0
    %225 = vmatpush.bf16.msra.mxu0 0
    %226 = vmatpush.bf16.msra.mxu0 0
    %227 = vmatpush.bf16.msra.mxu0 0
    %228 = vmatpush.bf16.msra.mxu0 0
    %229 = vmatpush.bf16.msra.mxu0 0
    %230 = vmatpush.bf16.msra.mxu0 0
    %231 = vmatpush.bf16.msra.mxu0 0
    %232 = vmatpush.bf16.msra.mxu0 %v223
    %233 = vmatmul.bf16.gmra.mxu0 %v210
    %v234 = vpop.f32.mrf.mxu0
    %v235 = vadd.f32 0.0, %v234
    %v236 = vpop.f32.mrf.mxu0
    %v237 = vadd.f32 0.0, %v236
    %238 = vmatmul.bf16.gmra.mxu0 %v213
    %v239 = vpop.f32.mrf.mxu0
    %v240 = vadd.f32 0.0, %v239
    %v241 = vpop.f32.mrf.mxu0
    %v242 = vadd.f32 0.0, %v241
    %243 = vmatmul.bf16.gmra.mxu0 %v216
    %v244 = vpop.f32.mrf.mxu0
    %v245 = vadd.f32 0.0, %v244
    %v246 = vpop.f32.mrf.mxu0
    %v247 = vadd.f32 0.0, %v246
    %248 = vmatmul.bf16.gmra.mxu0 %v219
    %v249 = vpop.f32.mrf.mxu0
    %v250 = vadd.f32 0.0, %v249
    %v251 = vpop.f32.mrf.mxu0
    %v252 = vadd.f32 0.0, %v251
    %253 = vdwg.mxu0
    %v255 = vsel %vm208, %v200, 0
    %v258 = vsel %vm208, %v201, 0
    %v261 = vsel %vm208, %v202, 0
    %v264 = vsel %vm208, %v203, 0
    %v267 = vsel %vm221, %v78, 0
    %269 = vmatpush.bf16.msra.mxu0 0
    %270 = vmatpush.bf16.msra.mxu0 0
    %271 = vmatpush.bf16.msra.mxu0 0
    %272 = vmatpush.bf16.msra.mxu0 0
    %273 = vmatpush.bf16.msra.mxu0 0
    %274 = vmatpush.bf16.msra.mxu0 0
    %275 = vmatpush.bf16.msra.mxu0 0
    %276 = vmatpush.bf16.msra.mxu0 %v267
    %277 = vmatmul.bf16.gmra.mxu0 %v255
    %v278 = vpop.f32.mrf.mxu0
    %v279 = vadd.f32 %v235, %v278
    %v280 = vpop.f32.mrf.mxu0
    %v281 = vadd.f32 %v237, %v280
    %282 = vmatmul.bf16.gmra.mxu0 %v258
    %v283 = vpop.f32.mrf.mxu0
    %v284 = vadd.f32 %v240, %v283
    %v285 = vpop.f32.mrf.mxu0
    %v286 = vadd.f32 %v242, %v285
    %287 = vmatmul.bf16.gmra.mxu0 %v261
    %v288 = vpop.f32.mrf.mxu0
    %v289 = vadd.f32 %v245, %v288
    %v290 = vpop.f32.mrf.mxu0
    %v291 = vadd.f32 %v247, %v290
    %292 = vmatmul.bf16.gmra.mxu0 %v264
    %v293 = vpop.f32.mrf.mxu0
    %v294 = vadd.f32 %v250, %v293
    %v295 = vpop.f32.mrf.mxu0
    %v296 = vadd.f32 %v252, %v295
    %297 = vdwg.mxu0
    %v298 = vpack.c.bf16 %v193, %v192
    %v299 = vpack.c.bf16 %v195, %v194
    %v300 = vpack.c.bf16 %v197, %v196
    %v301 = vpack.c.bf16 %v199, %v198
    %v303 = vsel %vm208, %v298, 0
    %v306 = vsel %vm208, %v299, 0
    %v309 = vsel %vm208, %v300, 0
    %v312 = vsel %vm208, %v301, 0
    %v315 = vsel %vm221, %v82, 0
    %317 = vmatpush.bf16.msra.mxu0 0
    %318 = vmatpush.bf16.msra.mxu0 0
    %319 = vmatpush.bf16.msra.mxu0 0
    %320 = vmatpush.bf16.msra.mxu0 0
    %321 = vmatpush.bf16.msra.mxu0 0
    %322 = vmatpush.bf16.msra.mxu0 0
    %323 = vmatpush.bf16.msra.mxu0 0
    %324 = vmatpush.bf16.msra.mxu0 %v315
    %325 = vmatmul.bf16.gmra.mxu0 %v303
    %v326 = vpop.f32.mrf.mxu0
    %v327 = vadd.f32 0.0, %v326
    %v328 = vpop.f32.mrf.mxu0
    %v329 = vadd.f32 0.0, %v328
    %330 = vmatmul.bf16.gmra.mxu0 %v306
    %v331 = vpop.f32.mrf.mxu0
    %v332 = vadd.f32 0.0, %v331
    %v333 = vpop.f32.mrf.mxu0
    %v334 = vadd.f32 0.0, %v333
    %335 = vmatmul.bf16.gmra.mxu0 %v309
    %v336 = vpop.f32.mrf.mxu0
    %v337 = vadd.f32 0.0, %v336
    %v338 = vpop.f32.mrf.mxu0
    %v339 = vadd.f32 0.0, %v338
    %340 = vmatmul.bf16.gmra.mxu0 %v312
    %v341 = vpop.f32.mrf.mxu0
    %v342 = vadd.f32 0.0, %v341
    %v343 = vpop.f32.mrf.mxu0
    %v344 = vadd.f32 0.0, %v343
    %345 = vdwg.mxu0
    %v346 = vadd.f32 %v279, %v327
    %v347 = vadd.f32 %v281, %v329
    %v348 = vadd.f32 %v284, %v332
    %v349 = vadd.f32 %v286, %v334
    %v350 = vadd.f32 %v289, %v337
    %v351 = vadd.f32 %v291, %v339
    %v352 = vadd.f32 %v294, %v342
    %v353 = vadd.f32 %v296, %v344
    %v355 = vperm.slane %v83, 0
    %v357 = vmul.f32 %v346, %v355
    %v358 = vmul.f32 %v347, %v355
    %v359 = vmul.f32 %v348, %v355
    %v360 = vmul.f32 %v349, %v355
    %v361 = vmul.f32 %v350, %v355
    %v362 = vmul.f32 %v351, %v355
    %v363 = vmul.f32 %v352, %v355
    %v364 = vmul.f32 %v353, %v355
    %v366 = vperm.slane %v84, 0
    %v368 = vadd.f32 %v357, %v366
    %v369 = vadd.f32 %v358, %v366
    %v370 = vadd.f32 %v359, %v366
    %v371 = vadd.f32 %v360, %v366
    %v372 = vadd.f32 %v361, %v366
    %v373 = vadd.f32 %v362, %v366
    %v374 = vadd.f32 %v363, %v366
    %v375 = vadd.f32 %v364, %v366
    %vm376 = vcmp.ge.f32.partialorder %v368, 0.0
    %vm377 = vcmp.ge.f32.partialorder %v369, 0.0
    %vm378 = vcmp.ge.f32.partialorder %v370, 0.0
    %vm379 = vcmp.ge.f32.partialorder %v371, 0.0
    %vm380 = vcmp.ge.f32.partialorder %v372, 0.0
    %vm381 = vcmp.ge.f32.partialorder %v373, 0.0
    %vm382 = vcmp.ge.f32.partialorder %v374, 0.0
    %vm383 = vcmp.ge.f32.partialorder %v375, 0.0
    %v384 = vmul.f32 %v368, 0.01
    %v385 = vmul.f32 %v369, 0.01
    %v386 = vmul.f32 %v370, 0.01
    %v387 = vmul.f32 %v371, 0.01
    %v388 = vmul.f32 %v372, 0.01
    %v389 = vmul.f32 %v373, 0.01
    %v390 = vmul.f32 %v374, 0.01
    %v391 = vmul.f32 %v375, 0.01
    %v392 = vsel %vm376, %v368, %v384
    %v393 = vsel %vm377, %v369, %v385
    %v394 = vsel %vm378, %v370, %v386
    %v395 = vsel %vm379, %v371, %v387
    %v396 = vsel %vm380, %v372, %v388
    %v397 = vsel %vm381, %v373, %v389
    %v398 = vsel %vm382, %v374, %v390
    %v399 = vsel %vm383, %v375, %v391
    %400 = vst [vmem:[#allocation2] sm:$0xff] %v392
    %401 = vst [vmem:[#allocation2 + $0x8] sm:$0xff] %v393
    %402 = vst [vmem:[#allocation2 + $0x10] sm:$0xff] %v394
    %403 = vst [vmem:[#allocation2 + $0x18] sm:$0xff] %v395
    %404 = vst [vmem:[#allocation2 + $0x20] sm:$0xff] %v396
    %405 = vst [vmem:[#allocation2 + $0x28] sm:$0xff] %v397
    %406 = vst [vmem:[#allocation2 + $0x30] sm:$0xff] %v398
    %407 = vst [vmem:[#allocation2 + $0x38] sm:$0xff] %v399
    %v408 = vld [vmem:[#allocation2] ss:$2 sm:$0xff]
    %s409 = scalar_lea.vmem [#allocation2], 16
    %v410 = vld [vmem:[%s409] ss:$2 sm:$0xff]
    %s411 = scalar_lea.vmem [#allocation2], 32
    %v412 = vld [vmem:[%s411] ss:$2 sm:$0xff]
    %s413 = scalar_lea.vmem [#allocation2], 48
    %v414 = vld [vmem:[%s413] ss:$2 sm:$0xff]
    %s415 = scalar_lea.vmem [#allocation2], 1
    %v416 = vld [vmem:[%s415] ss:$2 sm:$0xff]
    %s417 = scalar_lea.vmem [#allocation2], 17
    %v418 = vld [vmem:[%s417] ss:$2 sm:$0xff]
    %s419 = scalar_lea.vmem [#allocation2], 33
    %v420 = vld [vmem:[%s419] ss:$2 sm:$0xff]
    %s421 = scalar_lea.vmem [#allocation2], 49
    %v422 = vld [vmem:[%s421] ss:$2 sm:$0xff]
    %v423 = vmax.f32 %v408, %v416
    %v424 = vmax.f32 %v410, %v418
    %v425 = vmax.f32 %v412, %v420
    %v426 = vmax.f32 %v414, %v422
    %v427 = vld [vmem:[#allocation4] sm:$0xf]
    %v428 = vld [vmem:[#allocation4 + $0x4] sm:$0xf]
    %v429 = vld [vmem:[#allocation4 + $0x8] sm:$0xf]
    %v430 = vld [vmem:[#allocation4 + $0xc] sm:$0xf]
    %v431 = vld [vmem:[#allocation4 + $0x10] sm:$0xf]
    %v432 = vld [vmem:[#allocation4 + $0x14] sm:$0xf]
    %v433 = vld [vmem:[#allocation4 + $0x18] sm:$0xf]
    %v434 = vld [vmem:[#allocation4 + $0x1c] sm:$0xf]
    %v435 = vld [vmem:[#allocation4 + $0x20] sm:$0xf]
    %v436 = vld [vmem:[#allocation4 + $0x24] sm:$0xf]
    %v437 = vld [vmem:[#allocation4 + $0x28] sm:$0xf]
    %v438 = vld [vmem:[#allocation4 + $0x2c] sm:$0xf]
    %v439 = vld [vmem:[#allocation4 + $0x30] sm:$0xf]
    %v440 = vld [vmem:[#allocation4 + $0x34] sm:$0xf]
    %v441 = vld [vmem:[#allocation4 + $0x38] sm:$0xf]
    %v442 = vld [vmem:[#allocation4 + $0x3c] sm:$0xf]
    %s443 = scalar_lea.vmem [#allocation4], 64
    %v444 = vld [vmem:[%s443] sm:$0xf]
    %v445 = vld [vmem:[%s443 + $0x4] sm:$0xf]
    %v446 = vld [vmem:[%s443 + $0x8] sm:$0xf]
    %v447 = vld [vmem:[%s443 + $0xc] sm:$0xf]
    %v448 = vld [vmem:[%s443 + $0x10] sm:$0xf]
    %v449 = vld [vmem:[%s443 + $0x14] sm:$0xf]
    %v450 = vld [vmem:[%s443 + $0x18] sm:$0xf]
    %v451 = vld [vmem:[%s443 + $0x1c] sm:$0xf]
    %v452 = vld [vmem:[%s443 + $0x20] sm:$0xf]
    %v453 = vld [vmem:[%s443 + $0x24] sm:$0xf]
    %v454 = vld [vmem:[%s443 + $0x28] sm:$0xf]
    %v455 = vld [vmem:[%s443 + $0x2c] sm:$0xf]
    %v456 = vld [vmem:[%s443 + $0x30] sm:$0xf]
    %v457 = vld [vmem:[%s443 + $0x34] sm:$0xf]
    %v458 = vld [vmem:[%s443 + $0x38] sm:$0xf]
    %v459 = vld [vmem:[%s443 + $0x3c] sm:$0xf]
    %s460 = scalar_lea.vmem [#allocation4], 128
    %v461 = vld [vmem:[%s460] sm:$0xf]
    %v462 = vld [vmem:[%s460 + $0x4] sm:$0xf]
    %v463 = vld [vmem:[%s460 + $0x8] sm:$0xf]
    %v464 = vld [vmem:[%s460 + $0xc] sm:$0xf]
    %v465 = vld [vmem:[%s460 + $0x10] sm:$0xf]
    %v466 = vld [vmem:[%s460 + $0x14] sm:$0xf]
    %v467 = vld [vmem:[%s460 + $0x18] sm:$0xf]
    %v468 = vld [vmem:[%s460 + $0x1c] sm:$0xf]
    %v469 = vld [vmem:[%s460 + $0x20] sm:$0xf]
    %v470 = vld [vmem:[%s460 + $0x24] sm:$0xf]
    %v471 = vld [vmem:[%s460 + $0x28] sm:$0xf]
    %v472 = vld [vmem:[%s460 + $0x2c] sm:$0xf]
    %v473 = vld [vmem:[%s460 + $0x30] sm:$0xf]
    %v474 = vld [vmem:[%s460 + $0x34] sm:$0xf]
    %v475 = vld [vmem:[%s460 + $0x38] sm:$0xf]
    %v476 = vld [vmem:[%s460 + $0x3c] sm:$0xf]
    %s477 = scalar_lea.vmem %s3, 1
    %v478 = vld [vmem:[%s477] sm:$0x1]
    %s479 = scalar_lea.vmem %s4, 1
    %v480 = vld [vmem:[%s479] sm:$0x1]
    %v481 = vand.u32 %v86, 15
    %v482 = vand.u32 %v87, 15
    %v483 = vand.u32 %v88, 15
    %v484 = vand.u32 %v89, 15
    %vm485 = vcmp.eq.s32.totalorder %v481, 0
    %vm486 = vcmp.eq.s32.totalorder %v482, 0
    %vm487 = vcmp.eq.s32.totalorder %v483, 0
    %vm488 = vcmp.eq.s32.totalorder %v484, 0
    %v489 = vrot.slane %v423, 7
    %v490 = vrot.slane %v424, 7
    %v491 = vrot.slane %v425, 7
    %v492 = vrot.slane %v426, 7
    %v493 = vsel %vm118, %v491, %v492
    %v494 = vsel %vm118, %v490, %v491
    %v495 = vsel %vm118, %v489, %v490
    %v496 = vsel %vm118, %v492, %v489
    %v497 = vsel %vm485, 1, 0
    %v498 = vsel %vm486, 1, 0
    %v499 = vsel %vm487, 1, 0
    %v500 = vsel %vm488, 1, 0
    %vm501 = vcmp.eq.s32.totalorder %v497, 1
    %vm502 = vcmp.eq.s32.totalorder %v498, 1
    %vm503 = vcmp.eq.s32.totalorder %v499, 1
    %vm504 = vcmp.eq.s32.totalorder %v500, 1
    %v505 = vsel %vm501, 0.0, %v496
    %v506 = vsel %vm502, 0.0, %v495
    %v507 = vsel %vm503, 0.0, %v494
    %v508 = vsel %vm504, 0.0, %v493
    %vm509 = vcmp.eq.s32.totalorder %v481, 15
    %vm510 = vcmp.eq.s32.totalorder %v482, 15
    %vm511 = vcmp.eq.s32.totalorder %v483, 15
    %vm512 = vcmp.eq.s32.totalorder %v484, 15
    %v513 = vrot.slane %v423, 1
    %v514 = vrot.slane %v424, 1
    %v515 = vrot.slane %v425, 1
    %v516 = vrot.slane %v426, 1
    %v517 = vsel %vm167, %v515, %v516
    %v518 = vsel %vm167, %v514, %v515
    %v519 = vsel %vm167, %v513, %v514
    %v520 = vsel %vm167, %v516, %v513
    %v521 = vsel %vm509, 1, 0
    %v522 = vsel %vm510, 1, 0
    %v523 = vsel %vm511, 1, 0
    %v524 = vsel %vm512, 1, 0
    %vm525 = vcmp.eq.s32.totalorder %v521, 1
    %vm526 = vcmp.eq.s32.totalorder %v522, 1
    %vm527 = vcmp.eq.s32.totalorder %v523, 1
    %vm528 = vcmp.eq.s32.totalorder %v524, 1
    %v529 = vsel %vm525, 0.0, %v519
    %v530 = vsel %vm526, 0.0, %v518
    %v531 = vsel %vm527, 0.0, %v517
    %v532 = vsel %vm528, 0.0, %v520
    %v533 = vpack.c.bf16 %v506, %v505
    %v534 = vpack.c.bf16 %v508, %v507
    %v535 = vpack.c.bf16 %v424, %v423
    %v536 = vpack.c.bf16 %v426, %v425
    %v553 = vunpack.c.l.b16 %v444
    %v554 = vunpack.c.l.b16 %v445
    %v555 = vunpack.c.l.b16 %v446
    %v556 = vunpack.c.l.b16 %v447
    %v557 = vunpack.c.l.b16 %v448
    %v558 = vunpack.c.l.b16 %v449
    %v559 = vunpack.c.l.b16 %v450
    %v560 = vunpack.c.l.b16 %v451
    %v561 = vunpack.c.l.b16 %v452
    %v562 = vunpack.c.l.b16 %v453
    %v563 = vunpack.c.l.b16 %v454
    %v564 = vunpack.c.l.b16 %v455
    %v565 = vunpack.c.l.b16 %v456
    %v566 = vunpack.c.l.b16 %v457
    %v567 = vunpack.c.l.b16 %v458
    %v568 = vunpack.c.l.b16 %v459
    %v569 = vpack.c.b16 %v554, %v553
    %v570 = vpack.c.b16 %v556, %v555
    %v571 = vpack.c.b16 %v558, %v557
    %v572 = vpack.c.b16 %v560, %v559
    %v573 = vpack.c.b16 %v562, %v561
    %v574 = vpack.c.b16 %v564, %v563
    %v575 = vpack.c.b16 %v566, %v565
    %v576 = vpack.c.b16 %v568, %v567
    %585 = vmatpush.bf16.msra.mxu0 %v576
    %586 = vmatpush.bf16.msra.mxu0 %v575
    %587 = vmatpush.bf16.msra.mxu0 %v574
    %588 = vmatpush.bf16.msra.mxu0 %v573
    %589 = vmatpush.bf16.msra.mxu0 %v572
    %590 = vmatpush.bf16.msra.mxu0 %v571
    %591 = vmatpush.bf16.msra.mxu0 %v570
    %592 = vmatpush.bf16.msra.mxu0 %v569
    %593 = vmatmul.bf16.gmra.mxu0 %v535
    %v594 = vpop.f32.mrf.mxu0
    %v595 = vadd.f32 0.0, %v594
    %v596 = vpop.f32.mrf.mxu0
    %v597 = vadd.f32 0.0, %v596
    %598 = vmatmul.bf16.gmra.mxu0 %v536
    %v599 = vpop.f32.mrf.mxu0
    %v600 = vadd.f32 0.0, %v599
    %v601 = vpop.f32.mrf.mxu0
    %v602 = vadd.f32 0.0, %v601
    %603 = vdwg.mxu0
    %v620 = vunpack.c.l.b16 %v427
    %v621 = vunpack.c.l.b16 %v428
    %v622 = vunpack.c.l.b16 %v429
    %v623 = vunpack.c.l.b16 %v430
    %v624 = vunpack.c.l.b16 %v431
    %v625 = vunpack.c.l.b16 %v432
    %v626 = vunpack.c.l.b16 %v433
    %v627 = vunpack.c.l.b16 %v434
    %v628 = vunpack.c.l.b16 %v435
    %v629 = vunpack.c.l.b16 %v436
    %v630 = vunpack.c.l.b16 %v437
    %v631 = vunpack.c.l.b16 %v438
    %v632 = vunpack.c.l.b16 %v439
    %v633 = vunpack.c.l.b16 %v440
    %v634 = vunpack.c.l.b16 %v441
    %v635 = vunpack.c.l.b16 %v442
    %v636 = vpack.c.b16 %v621, %v620
    %v637 = vpack.c.b16 %v623, %v622
    %v638 = vpack.c.b16 %v625, %v624
    %v639 = vpack.c.b16 %v627, %v626
    %v640 = vpack.c.b16 %v629, %v628
    %v641 = vpack.c.b16 %v631, %v630
    %v642 = vpack.c.b16 %v633, %v632
    %v643 = vpack.c.b16 %v635, %v634
    %652 = vmatpush.bf16.msra.mxu0 %v643
    %653 = vmatpush.bf16.msra.mxu0 %v642
    %654 = vmatpush.bf16.msra.mxu0 %v641
    %655 = vmatpush.bf16.msra.mxu0 %v640
    %656 = vmatpush.bf16.msra.mxu0 %v639
    %657 = vmatpush.bf16.msra.mxu0 %v638
    %658 = vmatpush.bf16.msra.mxu0 %v637
    %659 = vmatpush.bf16.msra.mxu0 %v636
    %660 = vmatmul.bf16.gmra.mxu0 %v533
    %v661 = vpop.f32.mrf.mxu0
    %v662 = vadd.f32 %v595, %v661
    %v663 = vpop.f32.mrf.mxu0
    %v664 = vadd.f32 %v597, %v663
    %665 = vmatmul.bf16.gmra.mxu0 %v534
    %v666 = vpop.f32.mrf.mxu0
    %v667 = vadd.f32 %v600, %v666
    %v668 = vpop.f32.mrf.mxu0
    %v669 = vadd.f32 %v602, %v668
    %670 = vdwg.mxu0
    %v671 = vpack.c.bf16 %v530, %v529
    %v672 = vpack.c.bf16 %v532, %v531
    %v689 = vunpack.c.l.b16 %v461
    %v690 = vunpack.c.l.b16 %v462
    %v691 = vunpack.c.l.b16 %v463
    %v692 = vunpack.c.l.b16 %v464
    %v693 = vunpack.c.l.b16 %v465
    %v694 = vunpack.c.l.b16 %v466
    %v695 = vunpack.c.l.b16 %v467
    %v696 = vunpack.c.l.b16 %v468
    %v697 = vunpack.c.l.b16 %v469
    %v698 = vunpack.c.l.b16 %v470
    %v699 = vunpack.c.l.b16 %v471
    %v700 = vunpack.c.l.b16 %v472
    %v701 = vunpack.c.l.b16 %v473
    %v702 = vunpack.c.l.b16 %v474
    %v703 = vunpack.c.l.b16 %v475
    %v704 = vunpack.c.l.b16 %v476
    %v705 = vpack.c.b16 %v690, %v689
    %v706 = vpack.c.b16 %v692, %v691
    %v707 = vpack.c.b16 %v694, %v693
    %v708 = vpack.c.b16 %v696, %v695
    %v709 = vpack.c.b16 %v698, %v697
    %v710 = vpack.c.b16 %v700, %v699
    %v711 = vpack.c.b16 %v702, %v701
    %v712 = vpack.c.b16 %v704, %v703
    %721 = vmatpush.bf16.msra.mxu0 %v712
    %722 = vmatpush.bf16.msra.mxu0 %v711
    %723 = vmatpush.bf16.msra.mxu0 %v710
    %724 = vmatpush.bf16.msra.mxu0 %v709
    %725 = vmatpush.bf16.msra.mxu0 %v708
    %726 = vmatpush.bf16.msra.mxu0 %v707
    %727 = vmatpush.bf16.msra.mxu0 %v706
    %728 = vmatpush.bf16.msra.mxu0 %v705
    %729 = vmatmul.bf16.gmra.mxu0 %v671
    %v730 = vpop.f32.mrf.mxu0
    %v731 = vadd.f32 0.0, %v730
    %v732 = vpop.f32.mrf.mxu0
    %v733 = vadd.f32 0.0, %v732
    %734 = vmatmul.bf16.gmra.mxu0 %v672
    %v735 = vpop.f32.mrf.mxu0
    %v736 = vadd.f32 0.0, %v735
    %v737 = vpop.f32.mrf.mxu0
    %v738 = vadd.f32 0.0, %v737
    %739 = vdwg.mxu0
    %v740 = vadd.f32 %v662, %v731
    %v741 = vadd.f32 %v664, %v733
    %v742 = vadd.f32 %v667, %v736
    %v743 = vadd.f32 %v669, %v738
    %v745 = vperm.slane %v478, 0
    %v747 = vmul.f32 %v740, %v745
    %v748 = vmul.f32 %v741, %v745
    %v749 = vmul.f32 %v742, %v745
    %v750 = vmul.f32 %v743, %v745
    %v752 = vperm.slane %v480, 0
    %v754 = vadd.f32 %v747, %v752
    %v755 = vadd.f32 %v748, %v752
    %v756 = vadd.f32 %v749, %v752
    %v757 = vadd.f32 %v750, %v752
    %vm758 = vcmp.ge.f32.partialorder %v754, 0.0
    %vm759 = vcmp.ge.f32.partialorder %v755, 0.0
    %vm760 = vcmp.ge.f32.partialorder %v756, 0.0
    %vm761 = vcmp.ge.f32.partialorder %v757, 0.0
    %v762 = vmul.f32 %v754, 0.01
    %v763 = vmul.f32 %v755, 0.01
    %v764 = vmul.f32 %v756, 0.01
    %v765 = vmul.f32 %v757, 0.01
    %v766 = vsel %vm758, %v754, %v762
    %v767 = vsel %vm759, %v755, %v763
    %v768 = vsel %vm760, %v756, %v764
    %v769 = vsel %vm761, %v757, %v765
    %770 = vst [vmem:[#allocation2] sm:$0xff] %v766
    %771 = vst [vmem:[#allocation2 + $0x8] sm:$0xff] %v767
    %772 = vst [vmem:[#allocation2 + $0x10] sm:$0xff] %v768
    %773 = vst [vmem:[#allocation2 + $0x18] sm:$0xff] %v769
    %v774 = vld [vmem:[#allocation2] ss:$2 sm:$0xff]
    %s775 = scalar_lea.vmem [#allocation2], 16
    %v776 = vld [vmem:[%s775] ss:$2 sm:$0xff]
    %v777 = vld [vmem:[%s415] ss:$2 sm:$0xff]
    %v778 = vld [vmem:[%s417] ss:$2 sm:$0xff]
    %v779 = vmax.f32 %v774, %v777
    %v780 = vmax.f32 %v776, %v778
    %s781 = scalar_lea.vmem [#allocation4], 192
    %v782 = vld [vmem:[%s781] sm:$0xf]
    %v783 = vld [vmem:[%s781 + $0x4] sm:$0xf]
    %v784 = vld [vmem:[%s781 + $0x8] sm:$0xf]
    %v785 = vld [vmem:[%s781 + $0xc] sm:$0xf]
    %v786 = vld [vmem:[%s781 + $0x10] sm:$0xf]
    %v787 = vld [vmem:[%s781 + $0x14] sm:$0xf]
    %v788 = vld [vmem:[%s781 + $0x18] sm:$0xf]
    %v789 = vld [vmem:[%s781 + $0x1c] sm:$0xf]
    %v790 = vld [vmem:[%s781 + $0x20] sm:$0xf]
    %v791 = vld [vmem:[%s781 + $0x24] sm:$0xf]
    %v792 = vld [vmem:[%s781 + $0x28] sm:$0xf]
    %v793 = vld [vmem:[%s781 + $0x2c] sm:$0xf]
    %v794 = vld [vmem:[%s781 + $0x30] sm:$0xf]
    %v795 = vld [vmem:[%s781 + $0x34] sm:$0xf]
    %v796 = vld [vmem:[%s781 + $0x38] sm:$0xf]
    %v797 = vld [vmem:[%s781 + $0x3c] sm:$0xf]
    %s798 = scalar_lea.vmem [#allocation4], 256
    %v799 = vld [vmem:[%s798] sm:$0xf]
    %v800 = vld [vmem:[%s798 + $0x4] sm:$0xf]
    %v801 = vld [vmem:[%s798 + $0x8] sm:$0xf]
    %v802 = vld [vmem:[%s798 + $0xc] sm:$0xf]
    %v803 = vld [vmem:[%s798 + $0x10] sm:$0xf]
    %v804 = vld [vmem:[%s798 + $0x14] sm:$0xf]
    %v805 = vld [vmem:[%s798 + $0x18] sm:$0xf]
    %v806 = vld [vmem:[%s798 + $0x1c] sm:$0xf]
    %v807 = vld [vmem:[%s798 + $0x20] sm:$0xf]
    %v808 = vld [vmem:[%s798 + $0x24] sm:$0xf]
    %v809 = vld [vmem:[%s798 + $0x28] sm:$0xf]
    %v810 = vld [vmem:[%s798 + $0x2c] sm:$0xf]
    %v811 = vld [vmem:[%s798 + $0x30] sm:$0xf]
    %v812 = vld [vmem:[%s798 + $0x34] sm:$0xf]
    %v813 = vld [vmem:[%s798 + $0x38] sm:$0xf]
    %v814 = vld [vmem:[%s798 + $0x3c] sm:$0xf]
    %s815 = scalar_lea.vmem [#allocation4], 320
    %v816 = vld [vmem:[%s815] sm:$0xf]
    %v817 = vld [vmem:[%s815 + $0x4] sm:$0xf]
    %v818 = vld [vmem:[%s815 + $0x8] sm:$0xf]
    %v819 = vld [vmem:[%s815 + $0xc] sm:$0xf]
    %v820 = vld [vmem:[%s815 + $0x10] sm:$0xf]
    %v821 = vld [vmem:[%s815 + $0x14] sm:$0xf]
    %v822 = vld [vmem:[%s815 + $0x18] sm:$0xf]
    %v823 = vld [vmem:[%s815 + $0x1c] sm:$0xf]
    %v824 = vld [vmem:[%s815 + $0x20] sm:$0xf]
    %v825 = vld [vmem:[%s815 + $0x24] sm:$0xf]
    %v826 = vld [vmem:[%s815 + $0x28] sm:$0xf]
    %v827 = vld [vmem:[%s815 + $0x2c] sm:$0xf]
    %v828 = vld [vmem:[%s815 + $0x30] sm:$0xf]
    %v829 = vld [vmem:[%s815 + $0x34] sm:$0xf]
    %v830 = vld [vmem:[%s815 + $0x38] sm:$0xf]
    %v831 = vld [vmem:[%s815 + $0x3c] sm:$0xf]
    %s832 = scalar_lea.vmem %s3, 2
    %v833 = vld [vmem:[%s832] sm:$0x1]
    %s834 = scalar_lea.vmem %s4, 2
    %v835 = vld [vmem:[%s834] sm:$0x1]
    %v836 = vand.u32 %v86, 7
    %v837 = vand.u32 %v87, 7
    %vm838 = vcmp.eq.s32.totalorder %v836, 0
    %vm839 = vcmp.eq.s32.totalorder %v837, 0
    %v840 = vrot.slane %v779, 7
    %v841 = vrot.slane %v780, 7
    %v842 = vsel %vm118, %v840, %v841
    %v843 = vsel %vm118, %v841, %v840
    %v844 = vsel %vm838, 1, 0
    %v845 = vsel %vm839, 1, 0
    %vm846 = vcmp.eq.s32.totalorder %v844, 1
    %vm847 = vcmp.eq.s32.totalorder %v845, 1
    %v848 = vsel %vm846, 0.0, %v843
    %v849 = vsel %vm847, 0.0, %v842
    %vm850 = vcmp.eq.s32.totalorder %v836, 7
    %vm851 = vcmp.eq.s32.totalorder %v837, 7
    %v852 = vrot.slane %v779, 1
    %v853 = vrot.slane %v780, 1
    %v854 = vsel %vm167, %v852, %v853
    %v855 = vsel %vm167, %v853, %v852
    %v856 = vsel %vm850, 1, 0
    %v857 = vsel %vm851, 1, 0
    %vm858 = vcmp.eq.s32.totalorder %v856, 1
    %vm859 = vcmp.eq.s32.totalorder %v857, 1
    %v860 = vsel %vm858, 0.0, %v854
    %v861 = vsel %vm859, 0.0, %v855
    %v862 = vpack.c.bf16 %v849, %v848
    %v863 = vpack.c.bf16 %v780, %v779
    %v880 = vunpack.c.l.b16 %v799
    %v881 = vunpack.c.l.b16 %v800
    %v882 = vunpack.c.l.b16 %v801
    %v883 = vunpack.c.l.b16 %v802
    %v884 = vunpack.c.l.b16 %v803
    %v885 = vunpack.c.l.b16 %v804
    %v886 = vunpack.c.l.b16 %v805
    %v887 = vunpack.c.l.b16 %v806
    %v888 = vunpack.c.l.b16 %v807
    %v889 = vunpack.c.l.b16 %v808
    %v890 = vunpack.c.l.b16 %v809
    %v891 = vunpack.c.l.b16 %v810
    %v892 = vunpack.c.l.b16 %v811
    %v893 = vunpack.c.l.b16 %v812
    %v894 = vunpack.c.l.b16 %v813
    %v895 = vunpack.c.l.b16 %v814
    %v896 = vpack.c.b16 %v881, %v880
    %v897 = vpack.c.b16 %v883, %v882
    %v898 = vpack.c.b16 %v885, %v884
    %v899 = vpack.c.b16 %v887, %v886
    %v900 = vpack.c.b16 %v889, %v888
    %v901 = vpack.c.b16 %v891, %v890
    %v902 = vpack.c.b16 %v893, %v892
    %v903 = vpack.c.b16 %v895, %v894
    %912 = vmatpush.bf16.msra.mxu0 %v903
    %913 = vmatpush.bf16.msra.mxu0 %v902
    %914 = vmatpush.bf16.msra.mxu0 %v901
    %915 = vmatpush.bf16.msra.mxu0 %v900
    %916 = vmatpush.bf16.msra.mxu0 %v899
    %917 = vmatpush.bf16.msra.mxu0 %v898
    %918 = vmatpush.bf16.msra.mxu0 %v897
    %919 = vmatpush.bf16.msra.mxu0 %v896
    %920 = vmatmul.bf16.gmra.mxu0 %v863
    %v921 = vpop.f32.mrf.mxu0
    %v922 = vadd.f32 0.0, %v921
    %v923 = vpop.f32.mrf.mxu0
    %v924 = vadd.f32 0.0, %v923
    %925 = vdwg.mxu0
    %v942 = vunpack.c.l.b16 %v782
    %v943 = vunpack.c.l.b16 %v783
    %v944 = vunpack.c.l.b16 %v784
    %v945 = vunpack.c.l.b16 %v785
    %v946 = vunpack.c.l.b16 %v786
    %v947 = vunpack.c.l.b16 %v787
    %v948 = vunpack.c.l.b16 %v788
    %v949 = vunpack.c.l.b16 %v789
    %v950 = vunpack.c.l.b16 %v790
    %v951 = vunpack.c.l.b16 %v791
    %v952 = vunpack.c.l.b16 %v792
    %v953 = vunpack.c.l.b16 %v793
    %v954 = vunpack.c.l.b16 %v794
    %v955 = vunpack.c.l.b16 %v795
    %v956 = vunpack.c.l.b16 %v796
    %v957 = vunpack.c.l.b16 %v797
    %v958 = vpack.c.b16 %v943, %v942
    %v959 = vpack.c.b16 %v945, %v944
    %v960 = vpack.c.b16 %v947, %v946
    %v961 = vpack.c.b16 %v949, %v948
    %v962 = vpack.c.b16 %v951, %v950
    %v963 = vpack.c.b16 %v953, %v952
    %v964 = vpack.c.b16 %v955, %v954
    %v965 = vpack.c.b16 %v957, %v956
    %974 = vmatpush.bf16.msra.mxu0 %v965
    %975 = vmatpush.bf16.msra.mxu0 %v964
    %976 = vmatpush.bf16.msra.mxu0 %v963
    %977 = vmatpush.bf16.msra.mxu0 %v962
    %978 = vmatpush.bf16.msra.mxu0 %v961
    %979 = vmatpush.bf16.msra.mxu0 %v960
    %980 = vmatpush.bf16.msra.mxu0 %v959
    %981 = vmatpush.bf16.msra.mxu0 %v958
    %982 = vmatmul.bf16.gmra.mxu0 %v862
    %v983 = vpop.f32.mrf.mxu0
    %v984 = vadd.f32 %v922, %v983
    %v985 = vpop.f32.mrf.mxu0
    %v986 = vadd.f32 %v924, %v985
    %987 = vdwg.mxu0
    %v988 = vpack.c.bf16 %v861, %v860
    %v1005 = vunpack.c.l.b16 %v816
    %v1006 = vunpack.c.l.b16 %v817
    %v1007 = vunpack.c.l.b16 %v818
    %v1008 = vunpack.c.l.b16 %v819
    %v1009 = vunpack.c.l.b16 %v820
    %v1010 = vunpack.c.l.b16 %v821
    %v1011 = vunpack.c.l.b16 %v822
    %v1012 = vunpack.c.l.b16 %v823
    %v1013 = vunpack.c.l.b16 %v824
    %v1014 = vunpack.c.l.b16 %v825
    %v1015 = vunpack.c.l.b16 %v826
    %v1016 = vunpack.c.l.b16 %v827
    %v1017 = vunpack.c.l.b16 %v828
    %v1018 = vunpack.c.l.b16 %v829
    %v1019 = vunpack.c.l.b16 %v830
    %v1020 = vunpack.c.l.b16 %v831
    %v1021 = vpack.c.b16 %v1006, %v1005
    %v1022 = vpack.c.b16 %v1008, %v1007
    %v1023 = vpack.c.b16 %v1010, %v1009
    %v1024 = vpack.c.b16 %v1012, %v1011
    %v1025 = vpack.c.b16 %v1014, %v1013
    %v1026 = vpack.c.b16 %v1016, %v1015
    %v1027 = vpack.c.b16 %v1018, %v1017
    %v1028 = vpack.c.b16 %v1020, %v1019
    %1037 = vmatpush.bf16.msra.mxu0 %v1028
    %1038 = vmatpush.bf16.msra.mxu0 %v1027
    %1039 = vmatpush.bf16.msra.mxu0 %v1026
    %1040 = vmatpush.bf16.msra.mxu0 %v1025
    %1041 = vmatpush.bf16.msra.mxu0 %v1024
    %1042 = vmatpush.bf16.msra.mxu0 %v1023
    %1043 = vmatpush.bf16.msra.mxu0 %v1022
    %1044 = vmatpush.bf16.msra.mxu0 %v1021
    %1045 = vmatmul.bf16.gmra.mxu0 %v988
    %v1046 = vpop.f32.mrf.mxu0
    %v1047 = vadd.f32 0.0, %v1046
    %v1048 = vpop.f32.mrf.mxu0
    %v1049 = vadd.f32 0.0, %v1048
    %1050 = vdwg.mxu0
    %v1051 = vadd.f32 %v984, %v1047
    %v1052 = vadd.f32 %v986, %v1049
    %v1054 = vperm.slane %v833, 0
    %v1056 = vmul.f32 %v1051, %v1054
    %v1057 = vmul.f32 %v1052, %v1054
    %v1059 = vperm.slane %v835, 0
    %v1061 = vadd.f32 %v1056, %v1059
    %v1062 = vadd.f32 %v1057, %v1059
    %vm1063 = vcmp.ge.f32.partialorder %v1061, 0.0
    %vm1064 = vcmp.ge.f32.partialorder %v1062, 0.0
    %v1065 = vmul.f32 %v1061, 0.01
    %v1066 = vmul.f32 %v1062, 0.01
    %v1067 = vsel %vm1063, %v1061, %v1065
    %v1068 = vsel %vm1064, %v1062, %v1066
    %1069 = vst [vmem:[#allocation2] sm:$0xff] %v1067
    %1070 = vst [vmem:[#allocation2 + $0x8] sm:$0xff] %v1068
    %v1071 = vld [vmem:[#allocation2] ss:$2 sm:$0xff]
    %v1072 = vld [vmem:[%s415] ss:$2 sm:$0xff]
    %v1073 = vmax.f32 %v1071, %v1072
    %s1074 = scalar_lea.vmem [#allocation4], 384
    %v1075 = vld [vmem:[%s1074] sm:$0xf]
    %v1076 = vld [vmem:[%s1074 + $0x4] sm:$0xf]
    %v1077 = vld [vmem:[%s1074 + $0x8] sm:$0xf]
    %v1078 = vld [vmem:[%s1074 + $0xc] sm:$0xf]
    %v1079 = vld [vmem:[%s1074 + $0x10] sm:$0xf]
    %v1080 = vld [vmem:[%s1074 + $0x14] sm:$0xf]
    %v1081 = vld [vmem:[%s1074 + $0x18] sm:$0xf]
    %v1082 = vld [vmem:[%s1074 + $0x1c] sm:$0xf]
    %v1083 = vld [vmem:[%s1074 + $0x20] sm:$0xf]
    %v1084 = vld [vmem:[%s1074 + $0x24] sm:$0xf]
    %v1085 = vld [vmem:[%s1074 + $0x28] sm:$0xf]
    %v1086 = vld [vmem:[%s1074 + $0x2c] sm:$0xf]
    %v1087 = vld [vmem:[%s1074 + $0x30] sm:$0xf]
    %v1088 = vld [vmem:[%s1074 + $0x34] sm:$0xf]
    %v1089 = vld [vmem:[%s1074 + $0x38] sm:$0xf]
    %v1090 = vld [vmem:[%s1074 + $0x3c] sm:$0xf]
    %s1091 = scalar_lea.vmem [#allocation4], 448
    %v1092 = vld [vmem:[%s1091] sm:$0xf]
    %v1093 = vld [vmem:[%s1091 + $0x4] sm:$0xf]
    %v1094 = vld [vmem:[%s1091 + $0x8] sm:$0xf]
    %v1095 = vld [vmem:[%s1091 + $0xc] sm:$0xf]
    %v1096 = vld [vmem:[%s1091 + $0x10] sm:$0xf]
    %v1097 = vld [vmem:[%s1091 + $0x14] sm:$0xf]
    %v1098 = vld [vmem:[%s1091 + $0x18] sm:$0xf]
    %v1099 = vld [vmem:[%s1091 + $0x1c] sm:$0xf]
    %v1100 = vld [vmem:[%s1091 + $0x20] sm:$0xf]
    %v1101 = vld [vmem:[%s1091 + $0x24] sm:$0xf]
    %v1102 = vld [vmem:[%s1091 + $0x28] sm:$0xf]
    %v1103 = vld [vmem:[%s1091 + $0x2c] sm:$0xf]
    %v1104 = vld [vmem:[%s1091 + $0x30] sm:$0xf]
    %v1105 = vld [vmem:[%s1091 + $0x34] sm:$0xf]
    %v1106 = vld [vmem:[%s1091 + $0x38] sm:$0xf]
    %v1107 = vld [vmem:[%s1091 + $0x3c] sm:$0xf]
    %s1108 = scalar_lea.vmem [#allocation4], 512
    %v1109 = vld [vmem:[%s1108] sm:$0xf]
    %v1110 = vld [vmem:[%s1108 + $0x4] sm:$0xf]
    %v1111 = vld [vmem:[%s1108 + $0x8] sm:$0xf]
    %v1112 = vld [vmem:[%s1108 + $0xc] sm:$0xf]
    %v1113 = vld [vmem:[%s1108 + $0x10] sm:$0xf]
    %v1114 = vld [vmem:[%s1108 + $0x14] sm:$0xf]
    %v1115 = vld [vmem:[%s1108 + $0x18] sm:$0xf]
    %v1116 = vld [vmem:[%s1108 + $0x1c] sm:$0xf]
    %v1117 = vld [vmem:[%s1108 + $0x20] sm:$0xf]
    %v1118 = vld [vmem:[%s1108 + $0x24] sm:$0xf]
    %v1119 = vld [vmem:[%s1108 + $0x28] sm:$0xf]
    %v1120 = vld [vmem:[%s1108 + $0x2c] sm:$0xf]
    %v1121 = vld [vmem:[%s1108 + $0x30] sm:$0xf]
    %v1122 = vld [vmem:[%s1108 + $0x34] sm:$0xf]
    %v1123 = vld [vmem:[%s1108 + $0x38] sm:$0xf]
    %v1124 = vld [vmem:[%s1108 + $0x3c] sm:$0xf]
    %s1125 = scalar_lea.vmem %s3, 3
    %v1126 = vld [vmem:[%s1125] sm:$0x1]
    %s1127 = scalar_lea.vmem %s4, 3
    %v1128 = vld [vmem:[%s1127] sm:$0x1]
    %v1129 = vand.u32 %v86, 3
    %vm1130 = vcmp.eq.s32.totalorder %v1129, 0
    %v1131 = vrot.slane %v1073, 7
    %v1132 = vsel %vm1130, 1, 0
    %vm1133 = vcmp.eq.s32.totalorder %v1132, 1
    %v1134 = vsel %vm1133, 0.0, %v1131
    %vm1135 = vcmp.eq.s32.totalorder %v1129, 3
    %v1136 = vrot.slane %v1073, 1
    %v1137 = vsel %vm1135, 1, 0
    %vm1138 = vcmp.eq.s32.totalorder %v1137, 1
    %v1139 = vsel %vm1138, 0.0, %v1136
    %v1140 = vpack.c.bf16 %v1134, %v1134
    %v1141 = vpack.c.bf16 %v1073, %v1073
    %v1158 = vunpack.c.l.b16 %v1092
    %v1159 = vunpack.c.l.b16 %v1093
    %v1160 = vunpack.c.l.b16 %v1094
    %v1161 = vunpack.c.l.b16 %v1095
    %v1162 = vunpack.c.l.b16 %v1096
    %v1163 = vunpack.c.l.b16 %v1097
    %v1164 = vunpack.c.l.b16 %v1098
    %v1165 = vunpack.c.l.b16 %v1099
    %v1166 = vunpack.c.l.b16 %v1100
    %v1167 = vunpack.c.l.b16 %v1101
    %v1168 = vunpack.c.l.b16 %v1102
    %v1169 = vunpack.c.l.b16 %v1103
    %v1170 = vunpack.c.l.b16 %v1104
    %v1171 = vunpack.c.l.b16 %v1105
    %v1172 = vunpack.c.l.b16 %v1106
    %v1173 = vunpack.c.l.b16 %v1107
    %v1174 = vpack.c.b16 %v1159, %v1158
    %v1175 = vpack.c.b16 %v1161, %v1160
    %v1176 = vpack.c.b16 %v1163, %v1162
    %v1177 = vpack.c.b16 %v1165, %v1164
    %v1178 = vpack.c.b16 %v1167, %v1166
    %v1179 = vpack.c.b16 %v1169, %v1168
    %v1180 = vpack.c.b16 %v1171, %v1170
    %v1181 = vpack.c.b16 %v1173, %v1172
    %1190 = vmatpush.bf16.msra.mxu0 %v1181
    %1191 = vmatpush.bf16.msra.mxu0 %v1180
    %1192 = vmatpush.bf16.msra.mxu0 %v1179
    %1193 = vmatpush.bf16.msra.mxu0 %v1178
    %1194 = vmatpush.bf16.msra.mxu0 %v1177
    %1195 = vmatpush.bf16.msra.mxu0 %v1176
    %1196 = vmatpush.bf16.msra.mxu0 %v1175
    %1197 = vmatpush.bf16.msra.mxu0 %v1174
    %1198 = vmatmul.bf16.gmra.mxu0 %v1141
    %v1199 = vpop.f32.mrf.mxu0
    %v1200 = vadd.f32 0.0, %v1199
    %v1201 = vpop.f32.mrf.mxu0
    %1202 = vdwg.mxu0
    %v1219 = vunpack.c.l.b16 %v1075
    %v1220 = vunpack.c.l.b16 %v1076
    %v1221 = vunpack.c.l.b16 %v1077
    %v1222 = vunpack.c.l.b16 %v1078
    %v1223 = vunpack.c.l.b16 %v1079
    %v1224 = vunpack.c.l.b16 %v1080
    %v1225 = vunpack.c.l.b16 %v1081
    %v1226 = vunpack.c.l.b16 %v1082
    %v1227 = vunpack.c.l.b16 %v1083
    %v1228 = vunpack.c.l.b16 %v1084
    %v1229 = vunpack.c.l.b16 %v1085
    %v1230 = vunpack.c.l.b16 %v1086
    %v1231 = vunpack.c.l.b16 %v1087
    %v1232 = vunpack.c.l.b16 %v1088
    %v1233 = vunpack.c.l.b16 %v1089
    %v1234 = vunpack.c.l.b16 %v1090
    %v1235 = vpack.c.b16 %v1220, %v1219
    %v1236 = vpack.c.b16 %v1222, %v1221
    %v1237 = vpack.c.b16 %v1224, %v1223
    %v1238 = vpack.c.b16 %v1226, %v1225
    %v1239 = vpack.c.b16 %v1228, %v1227
    %v1240 = vpack.c.b16 %v1230, %v1229
    %v1241 = vpack.c.b16 %v1232, %v1231
    %v1242 = vpack.c.b16 %v1234, %v1233
    %1251 = vmatpush.bf16.msra.mxu0 %v1242
    %1252 = vmatpush.bf16.msra.mxu0 %v1241
    %1253 = vmatpush.bf16.msra.mxu0 %v1240
    %1254 = vmatpush.bf16.msra.mxu0 %v1239
    %1255 = vmatpush.bf16.msra.mxu0 %v1238
    %1256 = vmatpush.bf16.msra.mxu0 %v1237
    %1257 = vmatpush.bf16.msra.mxu0 %v1236
    %1258 = vmatpush.bf16.msra.mxu0 %v1235
    %1259 = vmatmul.bf16.gmra.mxu0 %v1140
    %v1260 = vpop.f32.mrf.mxu0
    %v1261 = vadd.f32 %v1200, %v1260
    %v1262 = vpop.f32.mrf.mxu0
    %1263 = vdwg.mxu0
    %v1264 = vpack.c.bf16 %v1139, %v1139
    %v1281 = vunpack.c.l.b16 %v1109
    %v1282 = vunpack.c.l.b16 %v1110
    %v1283 = vunpack.c.l.b16 %v1111
    %v1284 = vunpack.c.l.b16 %v1112
    %v1285 = vunpack.c.l.b16 %v1113
    %v1286 = vunpack.c.l.b16 %v1114
    %v1287 = vunpack.c.l.b16 %v1115
    %v1288 = vunpack.c.l.b16 %v1116
    %v1289 = vunpack.c.l.b16 %v1117
    %v1290 = vunpack.c.l.b16 %v1118
    %v1291 = vunpack.c.l.b16 %v1119
    %v1292 = vunpack.c.l.b16 %v1120
    %v1293 = vunpack.c.l.b16 %v1121
    %v1294 = vunpack.c.l.b16 %v1122
    %v1295 = vunpack.c.l.b16 %v1123
    %v1296 = vunpack.c.l.b16 %v1124
    %v1297 = vpack.c.b16 %v1282, %v1281
    %v1298 = vpack.c.b16 %v1284, %v1283
    %v1299 = vpack.c.b16 %v1286, %v1285
    %v1300 = vpack.c.b16 %v1288, %v1287
    %v1301 = vpack.c.b16 %v1290, %v1289
    %v1302 = vpack.c.b16 %v1292, %v1291
    %v1303 = vpack.c.b16 %v1294, %v1293
    %v1304 = vpack.c.b16 %v1296, %v1295
    %1313 = vmatpush.bf16.msra.mxu0 %v1304
    %1314 = vmatpush.bf16.msra.mxu0 %v1303
    %1315 = vmatpush.bf16.msra.mxu0 %v1302
    %1316 = vmatpush.bf16.msra.mxu0 %v1301
    %1317 = vmatpush.bf16.msra.mxu0 %v1300
    %1318 = vmatpush.bf16.msra.mxu0 %v1299
    %1319 = vmatpush.bf16.msra.mxu0 %v1298
    %1320 = vmatpush.bf16.msra.mxu0 %v1297
    %1321 = vmatmul.bf16.gmra.mxu0 %v1264
    %v1322 = vpop.f32.mrf.mxu0
    %v1323 = vadd.f32 0.0, %v1322
    %v1324 = vpop.f32.mrf.mxu0
    %1325 = vdwg.mxu0
    %v1326 = vadd.f32 %v1261, %v1323
    %v1328 = vperm.slane %v1126, 0
    %v1330 = vmul.f32 %v1326, %v1328
    %v1332 = vperm.slane %v1128, 0
    %v1334 = vadd.f32 %v1330, %v1332
    %vm1335 = vcmp.ge.f32.partialorder %v1334, 0.0
    %v1336 = vmul.f32 %v1334, 0.01
    %v1337 = vsel %vm1335, %v1334, %v1336
    %1338 = vst [vmem:[#allocation2] sm:$0xff] %v1337
    %v1339 = vld [vmem:[#allocation2] ss:$2 sm:$0xf]
    %v1340 = vld [vmem:[%s415] ss:$2 sm:$0xf]
    %v1341 = vmax.f32 %v1339, %v1340
    %1342 = vst [vmem:[#allocation2] sm:$0xf] %v1341
    %v1343 = vld [vmem:[#allocation2] ss:$2 sm:$0x3]
    %v1344 = vld [vmem:[%s415] ss:$2 sm:$0x3]
    %v1345 = vpack.c.bf16 %v1343, %v1343
    %v1346 = vpack.c.bf16 %v1344, %v1344
    %v1347 = vld [vmem:[#allocation6] sm:$0xff]
    %v1348 = vld [vmem:[#allocation6 + $0x8] sm:$0xff]
    %v1349 = vld [vmem:[#allocation6 + $0x10] sm:$0xff]
    %v1350 = vld [vmem:[#allocation6 + $0x18] sm:$0xff]
    %v1351 = vld [vmem:[#allocation6 + $0x20] sm:$0xff]
    %v1352 = vld [vmem:[#allocation6 + $0x28] sm:$0xff]
    %v1353 = vld [vmem:[#allocation6 + $0x30] sm:$0xff]
    %v1354 = vld [vmem:[#allocation6 + $0x38] sm:$0xff]
    %v1355 = vld [vmem:[#allocation6 + $0x40] sm:$0xff]
    %v1356 = vld [vmem:[#allocation6 + $0x48] sm:$0xff]
    %v1357 = vld [vmem:[#allocation6 + $0x50] sm:$0xff]
    %v1358 = vld [vmem:[#allocation6 + $0x58] sm:$0xff]
    %v1359 = vld [vmem:[#allocation6 + $0x60] sm:$0xff]
    %v1360 = vld [vmem:[#allocation6 + $0x68] sm:$0xff]
    %v1361 = vld [vmem:[#allocation6 + $0x70] sm:$0xff]
    %v1362 = vld [vmem:[#allocation6 + $0x78] sm:$0xff]
    %v1363 = vld [vmem:[#allocation6 + $0x80] sm:$0xff]
    %v1364 = vld [vmem:[#allocation6 + $0x88] sm:$0xff]
    %v1365 = vld [vmem:[#allocation6 + $0x90] sm:$0xff]
    %v1366 = vld [vmem:[#allocation6 + $0x98] sm:$0xff]
    %v1367 = vld [vmem:[#allocation6 + $0xa0] sm:$0xff]
    %v1368 = vld [vmem:[#allocation6 + $0xa8] sm:$0xff]
    %v1369 = vld [vmem:[#allocation6 + $0xb0] sm:$0xff]
    %v1370 = vld [vmem:[#allocation6 + $0xb8] sm:$0xff]
    %v1371 = vld [vmem:[#allocation6 + $0xc0] sm:$0xff]
    %v1372 = vld [vmem:[#allocation6 + $0xc8] sm:$0xff]
    %v1373 = vld [vmem:[#allocation6 + $0xd0] sm:$0xff]
    %v1374 = vld [vmem:[#allocation6 + $0xd8] sm:$0xff]
    %v1375 = vld [vmem:[#allocation6 + $0xe0] sm:$0xff]
    %v1376 = vld [vmem:[#allocation6 + $0xe8] sm:$0xff]
    %v1377 = vld [vmem:[#allocation6 + $0xf0] sm:$0xff]
    %v1378 = vld [vmem:[#allocation6 + $0xf8] sm:$0xff]
    %v1411 = vunpack.c.l.b16 %v1347
    %v1412 = vunpack.c.h.b16 %v1347
    %v1413 = vunpack.c.l.b16 %v1348
    %v1414 = vunpack.c.h.b16 %v1348
    %v1415 = vunpack.c.l.b16 %v1349
    %v1416 = vunpack.c.h.b16 %v1349
    %v1417 = vunpack.c.l.b16 %v1350
    %v1418 = vunpack.c.h.b16 %v1350
    %v1419 = vunpack.c.l.b16 %v1351
    %v1420 = vunpack.c.h.b16 %v1351
    %v1421 = vunpack.c.l.b16 %v1352
    %v1422 = vunpack.c.h.b16 %v1352
    %v1423 = vunpack.c.l.b16 %v1353
    %v1424 = vunpack.c.h.b16 %v1353
    %v1425 = vunpack.c.l.b16 %v1354
    %v1426 = vunpack.c.h.b16 %v1354
    %v1427 = vunpack.c.l.b16 %v1355
    %v1428 = vunpack.c.h.b16 %v1355
    %v1429 = vunpack.c.l.b16 %v1356
    %v1430 = vunpack.c.h.b16 %v1356
    %v1431 = vunpack.c.l.b16 %v1357
    %v1432 = vunpack.c.h.b16 %v1357
    %v1433 = vunpack.c.l.b16 %v1358
    %v1434 = vunpack.c.h.b16 %v1358
    %v1435 = vunpack.c.l.b16 %v1359
    %v1436 = vunpack.c.h.b16 %v1359
    %v1437 = vunpack.c.l.b16 %v1360
    %v1438 = vunpack.c.h.b16 %v1360
    %v1439 = vunpack.c.l.b16 %v1361
    %v1440 = vunpack.c.h.b16 %v1361
    %v1441 = vunpack.c.l.b16 %v1362
    %v1442 = vunpack.c.h.b16 %v1362
    %v1443 = vunpack.c.l.b16 %v1363
    %v1444 = vunpack.c.h.b16 %v1363
    %v1445 = vunpack.c.l.b16 %v1364
    %v1446 = vunpack.c.h.b16 %v1364
    %v1447 = vunpack.c.l.b16 %v1365
    %v1448 = vunpack.c.h.b16 %v1365
    %v1449 = vunpack.c.l.b16 %v1366
    %v1450 = vunpack.c.h.b16 %v1366
    %v1451 = vunpack.c.l.b16 %v1367
    %v1452 = vunpack.c.h.b16 %v1367
    %v1453 = vunpack.c.l.b16 %v1368
    %v1454 = vunpack.c.h.b16 %v1368
    %v1455 = vunpack.c.l.b16 %v1369
    %v1456 = vunpack.c.h.b16 %v1369
    %v1457 = vunpack.c.l.b16 %v1370
    %v1458 = vunpack.c.h.b16 %v1370
    %v1459 = vunpack.c.l.b16 %v1371
    %v1460 = vunpack.c.h.b16 %v1371
    %v1461 = vunpack.c.l.b16 %v1372
    %v1462 = vunpack.c.h.b16 %v1372
    %v1463 = vunpack.c.l.b16 %v1373
    %v1464 = vunpack.c.h.b16 %v1373
    %v1465 = vunpack.c.l.b16 %v1374
    %v1466 = vunpack.c.h.b16 %v1374
    %v1467 = vunpack.c.l.b16 %v1375
    %v1468 = vunpack.c.h.b16 %v1375
    %v1469 = vunpack.c.l.b16 %v1376
    %v1470 = vunpack.c.h.b16 %v1376
    %v1471 = vunpack.c.l.b16 %v1377
    %v1472 = vunpack.c.h.b16 %v1377
    %v1473 = vunpack.c.l.b16 %v1378
    %v1474 = vunpack.c.h.b16 %v1378
    %v1475 = vpack.c.b16 %v1413, %v1411
    %v1476 = vpack.c.b16 %v1414, %v1412
    %v1477 = vpack.c.b16 %v1417, %v1415
    %v1478 = vpack.c.b16 %v1418, %v1416
    %v1479 = vpack.c.b16 %v1421, %v1419
    %v1480 = vpack.c.b16 %v1422, %v1420
    %v1481 = vpack.c.b16 %v1425, %v1423
    %v1482 = vpack.c.b16 %v1426, %v1424
    %v1483 = vpack.c.b16 %v1429, %v1427
    %v1484 = vpack.c.b16 %v1430, %v1428
    %v1485 = vpack.c.b16 %v1433, %v1431
    %v1486 = vpack.c.b16 %v1434, %v1432
    %v1487 = vpack.c.b16 %v1437, %v1435
    %v1488 = vpack.c.b16 %v1438, %v1436
    %v1489 = vpack.c.b16 %v1441, %v1439
    %v1490 = vpack.c.b16 %v1442, %v1440
    %v1491 = vpack.c.b16 %v1445, %v1443
    %v1492 = vpack.c.b16 %v1446, %v1444
    %v1493 = vpack.c.b16 %v1449, %v1447
    %v1494 = vpack.c.b16 %v1450, %v1448
    %v1495 = vpack.c.b16 %v1453, %v1451
    %v1496 = vpack.c.b16 %v1454, %v1452
    %v1497 = vpack.c.b16 %v1457, %v1455
    %v1498 = vpack.c.b16 %v1458, %v1456
    %v1499 = vpack.c.b16 %v1461, %v1459
    %v1500 = vpack.c.b16 %v1462, %v1460
    %v1501 = vpack.c.b16 %v1465, %v1463
    %v1502 = vpack.c.b16 %v1466, %v1464
    %v1503 = vpack.c.b16 %v1469, %v1467
    %v1504 = vpack.c.b16 %v1470, %v1468
    %v1505 = vpack.c.b16 %v1473, %v1471
    %v1506 = vpack.c.b16 %v1474, %v1472
    %1539 = vmatpush.bf16.msra.mxu0 %v1489
    %1540 = vmatpush.bf16.msra.mxu0 %v1487
    %1541 = vmatpush.bf16.msra.mxu0 %v1485
    %1542 = vmatpush.bf16.msra.mxu0 %v1483
    %1543 = vmatpush.bf16.msra.mxu0 %v1481
    %1544 = vmatpush.bf16.msra.mxu0 %v1479
    %1545 = vmatpush.bf16.msra.mxu0 %v1477
    %1546 = vmatpush.bf16.msra.mxu0 %v1475
    %1547 = vmatmul.bf16.gmra.mxu0 %v1345
    %v1548 = vpop.f32.mrf.mxu0
    %v1549 = vadd.f32 0.0, %v1548
    %v1550 = vpop.f32.mrf.mxu0
    %1551 = vdwg.mxu0
    %1552 = vmatpush.bf16.msra.mxu0 %v1505
    %1553 = vmatpush.bf16.msra.mxu0 %v1503
    %1554 = vmatpush.bf16.msra.mxu0 %v1501
    %1555 = vmatpush.bf16.msra.mxu0 %v1499
    %1556 = vmatpush.bf16.msra.mxu0 %v1497
    %1557 = vmatpush.bf16.msra.mxu0 %v1495
    %1558 = vmatpush.bf16.msra.mxu0 %v1493
    %1559 = vmatpush.bf16.msra.mxu0 %v1491
    %1560 = vmatmul.bf16.gmra.mxu0 %v1346
    %v1561 = vpop.f32.mrf.mxu0
    %v1562 = vadd.f32 %v1549, %v1561
    %v1563 = vpop.f32.mrf.mxu0
    %1564 = vdwg.mxu0
    %1565 = vmatpush.bf16.msra.mxu0 %v1490
    %1566 = vmatpush.bf16.msra.mxu0 %v1488
    %1567 = vmatpush.bf16.msra.mxu0 %v1486
    %1568 = vmatpush.bf16.msra.mxu0 %v1484
    %1569 = vmatpush.bf16.msra.mxu0 %v1482
    %1570 = vmatpush.bf16.msra.mxu0 %v1480
    %1571 = vmatpush.bf16.msra.mxu0 %v1478
    %1572 = vmatpush.bf16.msra.mxu0 %v1476
    %1573 = vmatmul.bf16.gmra.mxu0 %v1345
    %v1574 = vpop.f32.mrf.mxu0
    %v1575 = vadd.f32 0.0, %v1574
    %v1576 = vpop.f32.mrf.mxu0
    %1577 = vdwg.mxu0
    %1578 = vmatpush.bf16.msra.mxu0 %v1506
    %1579 = vmatpush.bf16.msra.mxu0 %v1504
    %1580 = vmatpush.bf16.msra.mxu0 %v1502
    %1581 = vmatpush.bf16.msra.mxu0 %v1500
    %1582 = vmatpush.bf16.msra.mxu0 %v1498
    %1583 = vmatpush.bf16.msra.mxu0 %v1496
    %1584 = vmatpush.bf16.msra.mxu0 %v1494
    %1585 = vmatpush.bf16.msra.mxu0 %v1492
    %1586 = vmatmul.bf16.gmra.mxu0 %v1346
    %v1587 = vpop.f32.mrf.mxu0
    %v1588 = vadd.f32 %v1575, %v1587
    %v1589 = vpop.f32.mrf.mxu0
    %1590 = vdwg.mxu0
    %v1591 = vld [vmem:[%s6] sm:$0x3]
    %v1593 = vperm.slane %v1591, 0
    %v1594 = vperm.slane %v1591, 1
    %v1597 = vmul.f32 %v1562, %v1593
    %v1598 = vmul.f32 %v1588, %v1594
    %v1599 = vld [vmem:[%s7] sm:$0x3]
    %v1601 = vperm.slane %v1599, 0
    %v1602 = vperm.slane %v1599, 1
    %v1605 = vadd.f32 %v1597, %v1601
    %v1606 = vadd.f32 %v1598, %v1602
    %vm1607 = vcmp.ge.f32.partialorder %v1605, 0.0
    %vm1608 = vcmp.ge.f32.partialorder %v1606, 0.0
    %v1609 = vmul.f32 %v1605, 0.01
    %v1610 = vmul.f32 %v1606, 0.01
    %v1611 = vsel %vm1607, %v1605, %v1609
    %v1612 = vsel %vm1608, %v1606, %v1610
    %v1613 = vld [vmem:[%s8] sm:$0x3]
    %v1615 = vperm.slane %v1613, 0
    %v1616 = vperm.slane %v1613, 1
    %v1619 = vmul.f32 %v1611, %v1615
    %v1620 = vmul.f32 %v1612, %v1616
    %vm1621 = vcmask 1041408
    %v1622 = vsel %vm1621, %v1619, 0.0
    %v1623 = vsel %vm1621, %v1620, 0.0
    %v1624 = vadd.f32 %v1622, %v1623
    %1625 = vadd.xlane.f32.xlu0 %v1624
    %v1626 = vpop.xlane.xlu0 %1625
    %v1627 = vld [vmem:[#allocation3] sm:$0x1]
    %v1629 = vperm.slane %v1627, 0
    %v1631 = vadd.f32 %v1626, %v1629
    %vm1632 = vcmask 1024
    %1633 = vst.msk [vmem:[%s10] sm:$0x3] %vm1632, %v1631
    // Predicated region
    $region50: #{cnn4_forward.1} parent=1 // pred_check
      _
    $region51: #{cnn4_forward.1} parent=1 // pred_check_branch
      %1635 = sbr.rel (0) target = $region53
    $region52: #{cnn4_forward.1} parent=1 // pred_region
      _
    $region53: #{cnn4_forward.1} parent=1 // pred_fallthru
      _
    // Predicated region
    $region54: #{cnn4_forward.1} parent=1 // pred_check
      _
    $region55: #{cnn4_forward.1} parent=1 // pred_check_branch
      %1637 = sbr.rel (0) target = $region57
    $region56: #{cnn4_forward.1} parent=1 // pred_region
      _
    $region57: #{cnn4_forward.1} parent=1 // pred_fallthru
      _
    %1638 = vsyncpa [#allocation5], 1
    %1639 = vsyncpa [#allocation7], 1

</llo_original>
